<compile_context>
chip_gen: v6e
topology: v6e:2x2x1
jax: 0.10.0
libtpu: 0.0.40
codegen_flags: <defaults>
</compile_context>

<pallas_src>
import functools
import math

import jax
import jax.numpy as jnp
import numpy as np
from jax import lax
from jax.experimental import pallas as pl
from jax.experimental.pallas import tpu as pltpu


# Approximate transcendentals per output element (for pl.CostEstimate).
_TRANS_COST = {'tanh': 1, 'sigmoid': 2, 'sin': 1, 'mish': 3}


def _round_up(x, m):
    return ((x + m - 1) // m) * m


def _sublane_tile(dtype):
    return {4: 8, 2: 16, 1: 32}.get(jnp.dtype(dtype).itemsize, 8)


@functools.lru_cache(maxsize=None)
def _vmem_budget_bytes():
    # 75% of the per-core VMEM capacity (~96 MiB on v5e/v6e, ~48 MiB on v7x);
    # leaves headroom for Mosaic internal scratch.  Falls back to a v7x-safe
    # 48 MiB if the query is unavailable.
    try:
        cap = int(pltpu.get_tpu_info().vmem_capacity_bytes)
    except Exception:  # noqa: BLE001 - off-TPU / older API
        cap = 64 * 2**20
    return (cap * 3) // 4


# ----------------------------------------------------------------------------
# Activations (fused into the kernels, applied to the f32 accumulator)
# ----------------------------------------------------------------------------
def _apply_act(y, act, *, approx_ok):
    if act == 'leaky_relu':
        return jnp.where(y >= 0, y, 0.01 * y)
    if act == 'relu':
        return jnp.maximum(y, 0.0)
    if act == 'prelu':
        # TODO(synk): learnable slope in PyTorch; fixed to its default 0.25.
        return jnp.where(y >= 0, y, 0.25 * y)
    if act == 'mish':
        # x * tanh(softplus(x)); stable softplus using only exp/log/abs/max.
        sp = jnp.maximum(y, 0.0) + jnp.log(1.0 + jnp.exp(-jnp.abs(y)))
        return y * jnp.tanh(sp)
    if act == 'tanh':
        return jnp.tanh(y)
    if act == 'sigmoid':
        if approx_ok:
            # EUP approximate reciprocal: fine for bf16 outputs, keeps VALU free.
            return pl.reciprocal(1.0 + jnp.exp(-y), approx=True)
        return 1.0 / (1.0 + jnp.exp(-y))        # exact for f32 outputs
    if act == 'sin':
        return jnp.sin(y)
    if act == 'identity':
        return y
    raise ValueError(f'unknown activation: {act}')


# ----------------------------------------------------------------------------
# Fused single-kernel forward (intermediates never leave VMEM)
# ----------------------------------------------------------------------------
def _fused_kernel(x_ref, *refs, acts, mode_shapes, io_dtype, approx_ok):
    *w_refs, o_ref = refs
    cur = x_ref[...]                            # (I_0, S_0)
    n_modes = len(w_refs)
    for n in range(n_modes):                    # static unroll over modes
        I, S = mode_shapes[n]
        if n > 0:
            # In-kernel relayout to the next cyclic unfolding.  This is a
            # genuine data shuffle (the minor dim changes) performed entirely
            # in VMEM/vregs -- far cheaper than the full HBM round trip the
            # unfused path pays between modes.
            cur = cur.reshape(I, S)
        y = lax.dot_general(
            cur, w_refs[n][...],
            dimension_numbers=(((0,), (0,)), ((), ())),
            preferred_element_type=jnp.float32)             # (S, J) f32
        y = _apply_act(y, acts[n], approx_ok=approx_ok)
        cur = y.astype(io_dtype) if n + 1 < n_modes else y
    o_ref[...] = cur.astype(o_ref.dtype)


def _fused_footprint_ok(mode_shapes, dims_j):
    # Every intermediate is live in VMEM/vregs; account with lane/sublane
    # padding (the tiny J dims pad to 128 lanes) and stay very conservative.
    budget = min(_vmem_budget_bytes() // 4, 16 * 2**20)
    total = 0
    for (I, S), J in zip(mode_shapes, dims_j):
        total += _round_up(I, 8) * S * 4                         # (I, S) unfolding
        total += _round_up(S, 8) * _round_up(J, 128) * 4         # (S, J) f32 result
    return total <= budget


def _fused_forward(x2, weights_t, acts, mode_shapes, out_shape2d):
    io_dtype = x2.dtype
    itemsize = jnp.dtype(io_dtype).itemsize
    flops = sum(2 * I * S * int(w.shape[1])
                for (I, S), w in zip(mode_shapes, weights_t))
    trans = sum(_TRANS_COST.get(a, 0) * S * int(w.shape[1])
                for (I, S), w, a in zip(mode_shapes, weights_t, acts))
    bytes_accessed = (int(x2.size) + sum(int(w.size) for w in weights_t)
                      + out_shape2d[0] * out_shape2d[1]) * itemsize

    kernel = functools.partial(
        _fused_kernel, acts=tuple(acts), mode_shapes=tuple(mode_shapes),
        io_dtype=io_dtype, approx_ok=(itemsize == 2))

    return pl.pallas_call(
        kernel,
        out_shape=jax.ShapeDtypeStruct(out_shape2d, io_dtype),
        compiler_params=pltpu.CompilerParams(
            vmem_limit_bytes=int(_vmem_budget_bytes())),
        cost_estimate=pl.CostEstimate(
            flops=int(flops), transcendentals=int(trans),
            bytes_accessed=int(bytes_accessed)),
    )(x2, *weights_t)


# ----------------------------------------------------------------------------
# Chained path: one Pallas kernel per mode
#   out[s, j] = act( sum_i x[i, s] * wt[i, j] )
# ----------------------------------------------------------------------------
def _mode_kernel(x_ref, wt_ref, o_ref, *, act, approx_ok):
    # x_ref : (I, St)  unfolding tile; contraction dim on sublanes
    # wt_ref: (I, J)   pre-transposed weight (RHS contracts its major axis)
    # o_ref : (St, J)  activated tile; row-major == next mode's unfolding
    y = lax.dot_general(
        x_ref[...], wt_ref[...],
        dimension_numbers=(((0,), (0,)), ((), ())),
        preferred_element_type=jnp.float32)                   # (St, J) f32
    o_ref[...] = _apply_act(y, act, approx_ok=approx_ok).astype(o_ref.dtype)


def _mode_matmul_act(x2, wt, act, *, lane_tile):
    """x2: (I, S) unfolding, wt: (I, J) pre-transposed weight -> (S, J)."""
    I, S = x2.shape
    Iw, J = wt.shape
    assert Iw == I
    dtype = x2.dtype
    itemsize = jnp.dtype(dtype).itemsize
    sub = _sublane_tile(dtype)
    budget = _vmem_budget_bytes()
    headroom = 2 * 2**20                       # Mosaic internal scratch, misc.

    def padded_block_bytes(t):
        # Padded-dim accounting: I pads to the sublane tile, J pads to 128
        # lanes; input/output/weight blocks are double buffered and the f32
        # matmul accumulator is included.
        lhs = _round_up(I, sub) * t * itemsize
        w = _round_up(I, sub) * _round_up(J, 128) * itemsize
        out = _round_up(t, sub) * _round_up(J, 128) * itemsize
        acc = t * _round_up(J, 128) * 4
        return 2 * (lhs + w + out) + acc

    # Largest lane tile (multiple of 128) that fits the padded VMEM budget.
    tile = min(lane_tile, _round_up(S, 128))
    while tile > 128 and padded_block_bytes(tile) + headroom > budget:
        tile = max(128, (tile // 2 // 128) * 128)

    if S <= tile:
        tile, num_blocks = S, 1                # single full-extent block
    else:
        num_blocks = pl.cdiv(S, tile)
        if num_blocks % 2 == 1:
            # v7x megacore: keep the "parallel" grid even so neither
            # TensorCore idles (best effort; irrelevant on v5e/v6e).
            t2 = max(128, _round_up(pl.cdiv(S, num_blocks + 1), 128))
            if pl.cdiv(S, t2) % 2 == 0:
                tile, num_blocks = t2, pl.cdiv(S, t2)

    flops = 2 * I * S * J
    transcendentals = _TRANS_COST.get(act, 0) * S * J
    bytes_accessed = (I * S + I * J + S * J) * itemsize
    vmem_limit = int(min(budget,
                         max(16 * 2**20, 2 * padded_block_bytes(tile) + headroom)))

    return pl.pallas_call(
        functools.partial(_mode_kernel, act=act, approx_ok=(itemsize == 2)),
        out_shape=jax.ShapeDtypeStruct((S, J), dtype),
        grid=(num_blocks,),
        in_specs=[
            pl.BlockSpec((I, tile), lambda s: (0, s)),
            pl.BlockSpec((I, J), lambda s: (0, 0)),
        ],
        out_specs=pl.BlockSpec((tile, J), lambda s: (s, 0)),
        compiler_params=pltpu.CompilerParams(
            dimension_semantics=("parallel",),
            vmem_limit_bytes=vmem_limit,
        ),
        cost_estimate=pl.CostEstimate(
            flops=int(flops), transcendentals=int(transcendentals),
            bytes_accessed=int(bytes_accessed)),
    )(x2, wt)


# ----------------------------------------------------------------------------
# Public forward
# ----------------------------------------------------------------------------
def prepare_weights(weights):
    """Pre-transpose module-layout weights (dim_in[n], dim_out[n]) -> (I_n, J_n).

    Done once at init time so no per-forward XLA transposes remain."""
    return [jnp.asarray(w).T for w in weights]


def multi_nonlinear_forward(x, weights_t, acts, *, lane_tile=2048,
                            compute_dtype=None, fuse="auto"):
    """Pallas implementation of MultiNonLinear.forward.

    x         : tensor with x.shape == tuple(dim_out)
    weights_t : list of PRE-TRANSPOSED weights, weights_t[n]: (dim_out[n], dim_in[n])
    acts      : list of activation names (a length-1 list is broadcast)
    lane_tile : lane tile for the chained path; keep >= 512 in real runs
                (smaller values are correctness-coverage configs only).
    fuse      : "auto" (fuse when VMEM allows, eager-mode fallback otherwise),
                True (force fused), False (force chained).
    """
    N = x.ndim
    acts = list(acts)
    if len(acts) == 1:
        acts = acts * N
    assert len(weights_t) == N and len(acts) == N
    assert lane_tile % 128 == 0 and lane_tile >= 128
    for n in range(N):
        assert weights_t[n].shape[0] == x.shape[n], (n, weights_t[n].shape, x.shape)

    if compute_dtype is not None:     # bf16 pays off on v5e too (lowest HBM BW)
        x = x.astype(compute_dtype)
        weights_t = [w.astype(compute_dtype) for w in weights_t]

    dims_i = [int(d) for d in x.shape]               # dim_out
    dims_j = [int(w.shape[1]) for w in weights_t]    # dim_in

    # Cyclic-unfolding shape chain: at mode n the running flat tensor is
    # (I_n, S_n) with logical axis order (i_n, ..., i_{N-1}, j_0, ..., j_{n-1}).
    mode_shapes = []
    numel = 1
    for d in dims_i:
        numel *= d
    for n in range(N):
        I = dims_i[n]
        S = numel // I
        mode_shapes.append((I, S))
        numel = S * dims_j[n]
    out_rows = numel // dims_j[-1]                   # prod(dims_j[:-1])

    want_fused = fuse is True or (fuse == "auto"
                                  and _fused_footprint_ok(mode_shapes, dims_j))
    if want_fused:
        try:
            out2 = _fused_forward(x.reshape(mode_shapes[0]), weights_t, acts,
                                  tuple(mode_shapes), (out_rows, dims_j[-1]))
            # Force compile+run now so that (in eager mode) an unsupported
            # in-kernel relayout on this toolchain falls back cleanly.
            out2 = jax.block_until_ready(out2)
            return out2.reshape(tuple(dims_j))
        except Exception:   # noqa: BLE001 - fall back to the chained kernels
            if fuse is True:
                raise

    # Chained path: one pallas_call per mode; only metadata reshapes between.
    cur = x
    for n in range(N):
        I, S = mode_shapes[n]
        x2 = cur.reshape(I, S)                       # metadata reshape, no copy
        cur = _mode_matmul_act(x2, weights_t[n], acts[n], lane_tile=lane_tile)
    return cur.reshape(tuple(dims_j))


# ----------------------------------------------------------------------------
# Deterministic parameter init (matches nn.init.kaiming_uniform_,
# a=0.01, mode='fan_in', nonlinearity='leaky_relu'; fan_in = weight.shape[1])
# ----------------------------------------------------------------------------
def init_weights(key, dim_in, dim_out, dtype=jnp.float32):
    weights = []
    a = 0.01
    gain = math.sqrt(2.0 / (1.0 + a * a))
    for di, do in zip(dim_in, dim_out):
        key, sub = jax.random.split(key)
        fan_in = do                                  # second dim of (di, do)
        bound = gain * math.sqrt(3.0 / fan_in)
        w = jax.random.uniform(sub, (di, do), dtype=dtype,
                               minval=-bound, maxval=bound)
        weights.append(w)
    return weights


# ----------------------------------------------------------------------------
# Pure-JAX reference (mirrors the PyTorch n_mode_prod exactly)
# ----------------------------------------------------------------------------
def _apply_act_ref(y, act):
    if act == 'leaky_relu':
        return jnp.where(y >= 0, y, 0.01 * y)
    if act == 'relu':
        return jax.nn.relu(y)
    if act == 'prelu':
        return jnp.where(y >= 0, y, 0.25 * y)
    if act == 'mish':
        return y * jnp.tanh(jax.nn.softplus(y))
    if act == 'tanh':
        return jnp.tanh(y)
    if act == 'sigmoid':
        return jax.nn.sigmoid(y)
    if act == 'sin':
        return jnp.sin(y)
    if act == 'identity':
        return y
    raise ValueError(act)


def _reference_forward(x, weights, acts):
    for n in range(x.ndim):
        w = weights[n]                               # (J, K), K = x.shape[n]
        x = jnp.moveaxis(jnp.tensordot(x, w, axes=([n], [1])), -1, n)
        x = _apply_act_ref(x, acts[n])
    return x


if __name__ == "__main__":
    key = jax.random.PRNGKey(0)
    k_x, k_w = jax.random.split(key)

    # Module configuration (module semantics: x.shape == tuple(dim_out),
    # output.shape == tuple(dim_in)).
    dim_out = [2, 4, 16, 16]          # input tensor dims
    dim_in = [4, 8, 16, 32]           # output tensor dims
    acts = ['leaky_relu', 'sin', 'tanh', 'identity']

    x = jax.random.normal(k_x, tuple(dim_out), dtype=jnp.float32)
    weights = init_weights(k_w, dim_in, dim_out)     # module layout (J, I)
    weights_t = prepare_weights(weights)             # (I, J), transposed once

    ref = jax.block_until_ready(_reference_forward(x, weights, acts))

    # 1) Default path: fused single-kernel forward (auto-falls back to the
    #    chained path if the in-kernel relayout is rejected by this toolchain).
    out = jax.block_until_ready(multi_nonlinear_forward(x, weights_t, acts))
    assert out.shape == tuple(dim_in), (out.shape, dim_in)
    np.testing.assert_allclose(np.asarray(out), np.asarray(ref),
                               rtol=1e-5, atol=1e-5)

    # 2) Chained per-mode kernels (the large-tensor path): exercises the
    #    1-D "parallel" grid with an even block count and a masked partial
    #    last block (lane_tile=384 is a coverage config, not a perf config).
    out_c = jax.block_until_ready(
        multi_nonlinear_forward(x, weights_t, acts, fuse=False, lane_tile=384))
    np.testing.assert_allclose(np.asarray(out_c), np.asarray(ref),
                               rtol=1e-5, atol=1e-5)

    # 3) bf16 compute path (bf16 MXU inputs, f32 accumulation + activations).
    acts2 = ['mish', 'sigmoid', 'relu', 'prelu']
    out16 = jax.block_until_ready(
        multi_nonlinear_forward(x, weights_t, acts2, compute_dtype=jnp.bfloat16))
    x16 = x.astype(jnp.bfloat16).astype(jnp.float32)
    w16 = [w.astype(jnp.bfloat16).astype(jnp.float32) for w in weights]
    ref16 = jax.block_until_ready(_reference_forward(x16, w16, acts2))
    np.testing.assert_allclose(np.asarray(out16.astype(jnp.float32)),
                               np.asarray(ref16), rtol=5e-2, atol=5e-2)

    print("KERNEL_OK")
</pallas_src>

<mosaic_0001>
module attributes {stable_mosaic.version = 11 : i64} {
  func.func @_fused_kernel(%arg0: memref<2x1024xf32, #tpu.memory_space<vmem>>, %arg1: memref<2x4xf32, #tpu.memory_space<vmem>>, %arg2: memref<4x8xf32, #tpu.memory_space<vmem>>, %arg3: memref<16x16xf32, #tpu.memory_space<vmem>>, %arg4: memref<16x32xf32, #tpu.memory_space<vmem>>, %arg5: memref<512x32xf32, #tpu.memory_space<vmem>>) attributes {dimension_semantics = [], scalar_prefetch = 0 : i64, scratch_operands = 0 : i64, tpu.core_type = #tpu.core_type<tc>} {
    %c0 = arith.constant 0 : index
    %c0_0 = arith.constant 0 : index
    %0 = vector.load %arg0[%c0, %c0_0] : memref<2x1024xf32, #tpu.memory_space<vmem>>, vector<2x1024xf32>
    %c0_1 = arith.constant 0 : index
    %c0_2 = arith.constant 0 : index
    %1 = vector.load %arg1[%c0_1, %c0_2] : memref<2x4xf32, #tpu.memory_space<vmem>>, vector<2x4xf32>
    %cst = arith.constant dense<0.000000e+00> : vector<1024x4xf32>
    %2 = tpu.matmul %0, %1, %cst {dimension_numbers = #tpu.dot_dimension_numbers<[0], [0], [1], [1], [0, 1, 1, 1], [], []>} : vector<2x1024xf32>, vector<2x4xf32>, vector<1024x4xf32> -> vector<1024x4xf32>
    %cst_3 = arith.constant 0.000000e+00 : f32
    %3 = vector.broadcast %cst_3 : f32 to vector<1024x4xf32>
    %4 = arith.cmpf oge, %2, %3 : vector<1024x4xf32>
    %cst_4 = arith.constant 0.00999999977 : f32
    %5 = vector.broadcast %cst_4 : f32 to vector<1024x4xf32>
    %6 = arith.mulf %5, %2 : vector<1024x4xf32>
    %7 = arith.select %4, %2, %6 : vector<1024x4xi1>, vector<1024x4xf32>
    %8 = vector.shape_cast %7 : vector<1024x4xf32> to vector<4x1024xf32>
    %c0_5 = arith.constant 0 : index
    %c0_6 = arith.constant 0 : index
    %9 = vector.load %arg2[%c0_5, %c0_6] : memref<4x8xf32, #tpu.memory_space<vmem>>, vector<4x8xf32>
    %cst_7 = arith.constant dense<0.000000e+00> : vector<1024x8xf32>
    %10 = tpu.matmul %8, %9, %cst_7 {dimension_numbers = #tpu.dot_dimension_numbers<[0], [0], [1], [1], [0, 1, 1, 1], [], []>} : vector<4x1024xf32>, vector<4x8xf32>, vector<1024x8xf32> -> vector<1024x8xf32>
    %11 = math.sin %10 : vector<1024x8xf32>
    %12 = vector.shape_cast %11 : vector<1024x8xf32> to vector<16x512xf32>
    %c0_8 = arith.constant 0 : index
    %c0_9 = arith.constant 0 : index
    %13 = vector.load %arg3[%c0_8, %c0_9] : memref<16x16xf32, #tpu.memory_space<vmem>>, vector<16x16xf32>
    %cst_10 = arith.constant dense<0.000000e+00> : vector<512x16xf32>
    %14 = tpu.matmul %12, %13, %cst_10 {dimension_numbers = #tpu.dot_dimension_numbers<[0], [0], [1], [1], [0, 1, 1, 1], [], []>} : vector<16x512xf32>, vector<16x16xf32>, vector<512x16xf32> -> vector<512x16xf32>
    %15 = math.tanh %14 : vector<512x16xf32>
    %16 = vector.shape_cast %15 : vector<512x16xf32> to vector<16x512xf32>
    %c0_11 = arith.constant 0 : index
    %c0_12 = arith.constant 0 : index
    %17 = vector.load %arg4[%c0_11, %c0_12] : memref<16x32xf32, #tpu.memory_space<vmem>>, vector<16x32xf32>
    %cst_13 = arith.constant dense<0.000000e+00> : vector<512x32xf32>
    %18 = tpu.matmul %16, %17, %cst_13 {dimension_numbers = #tpu.dot_dimension_numbers<[0], [0], [1], [1], [0, 1, 1, 1], [], []>} : vector<16x512xf32>, vector<16x32xf32>, vector<512x32xf32> -> vector<512x32xf32>
    %c0_14 = arith.constant 0 : index
    %c0_15 = arith.constant 0 : index
    %19 = vector.load %arg5[%c0_14, %c0_15] : memref<512x32xf32, #tpu.memory_space<vmem>>, vector<512x32xf32>
    tpu.vector_store %arg5[%c0_14, %c0_15], %18 {strides = array<i32>} : memref<512x32xf32, #tpu.memory_space<vmem>>, vector<512x32xf32>,
    return
  }
}

module attributes {stable_mosaic.version = 11 : i64} {
  func.func @_mode_kernel(%arg0: i32, %arg1: memref<2x1024xf32, #tpu.memory_space<vmem>>, %arg2: memref<2x4xf32, #tpu.memory_space<vmem>>, %arg3: memref<1024x4xf32, #tpu.memory_space<vmem>>) attributes {dimension_semantics = [#tpu.dimension_semantics<parallel>], iteration_bounds = array<i64: 1>, scalar_prefetch = 0 : i64, scratch_operands = 0 : i64, tpu.core_type = #tpu.core_type<tc>, window_params = [{transform_indices = @transform_0, window_bounds = array<i64: 2, 1024>}, {pipeline_mode = #tpu.pipeline_mode<synchronous>, transform_indices = @transform_1, window_bounds = array<i64: 2, 4>}, {transform_indices = @transform_2, window_bounds = array<i64: 1024, 4>}]} {
    %c0 = arith.constant 0 : index
    %c0_0 = arith.constant 0 : index
    %0 = vector.load %arg1[%c0, %c0_0] : memref<2x1024xf32, #tpu.memory_space<vmem>>, vector<2x1024xf32>
    %c0_1 = arith.constant 0 : index
    %c0_2 = arith.constant 0 : index
    %1 = vector.load %arg2[%c0_1, %c0_2] : memref<2x4xf32, #tpu.memory_space<vmem>>, vector<2x4xf32>
    %cst = arith.constant dense<0.000000e+00> : vector<1024x4xf32>
    %2 = tpu.matmul %0, %1, %cst {dimension_numbers = #tpu.dot_dimension_numbers<[0], [0], [1], [1], [0, 1, 1, 1], [], []>} : vector<2x1024xf32>, vector<2x4xf32>, vector<1024x4xf32> -> vector<1024x4xf32>
    %cst_3 = arith.constant 0.000000e+00 : f32
    %3 = vector.broadcast %cst_3 : f32 to vector<1024x4xf32>
    %4 = arith.cmpf oge, %2, %3 : vector<1024x4xf32>
    %cst_4 = arith.constant 0.00999999977 : f32
    %5 = vector.broadcast %cst_4 : f32 to vector<1024x4xf32>
    %6 = arith.mulf %5, %2 : vector<1024x4xf32>
    %7 = arith.select %4, %2, %6 : vector<1024x4xi1>, vector<1024x4xf32>
    %c0_5 = arith.constant 0 : index
    %c0_6 = arith.constant 0 : index
    %8 = vector.load %arg3[%c0_5, %c0_6] : memref<1024x4xf32, #tpu.memory_space<vmem>>, vector<1024x4xf32>
    tpu.vector_store %arg3[%c0_5, %c0_6], %7 {strides = array<i32>} : memref<1024x4xf32, #tpu.memory_space<vmem>>, vector<1024x4xf32>,
    return
  }
  func.func @transform_0(%arg0: i32) -> (i32, i32) {
    %c0_i32 = arith.constant 0 : i32
    %c0_i32_0 = arith.constant 0 : i32
    return %c0_i32, %arg0 : i32, i32
  }
  func.func @transform_1(%arg0: i32) -> (i32, i32) {
    %c0_i32 = arith.constant 0 : i32
    %c0_i32_0 = arith.constant 0 : i32
    %c0_i32_1 = arith.constant 0 : i32
    return %c0_i32, %c0_i32_0 : i32, i32
  }
  func.func @transform_2(%arg0: i32) -> (i32, i32) {
    %c0_i32 = arith.constant 0 : i32
    %c0_i32_0 = arith.constant 0 : i32
    return %arg0, %c0_i32 : i32, i32
  }
}

</mosaic_0001>

<llo_original>
// kernel: tpu_custom_call.1
$region0: #{tpu_custom_call.1}
  #allocation0 [shape = 'u32[]', space=smem, size = 0x4, offset = 0x4, fixed_abs, tag = 'smem constant byte address 0x4 - core index']
  #allocation1 [shape = 'u32[144,128]{1,0:T(1,128)}', space=vmem, size = 0x12000, scoped, tag = 'internal scratch']
  %s0 = inlined_call_operand.hbm [shape: f32[2,1024], index: 0, kind: input, shape index: {}]
  %s1 = inlined_call_operand.hbm [shape: f32[2,4], index: 1, kind: input, shape index: {}]
  %s2 = inlined_call_operand.vmem [shape: f32[1024,4], index: 2, kind: output, shape index: {}]
  %s3 = sld [smem:[#allocation0]]
  $region26: #{tpu_custom_call.1} parent=0
    _
  %s5 = ssub.s32 1, %s3
  %s6 = scalar_select 0, %s5, %s3
  $region1: #{tpu_custom_call.1} parent=0
    #allocation2 [shape = 'u8[8192]{0}', space=vmem, size = 0x2000, scoped, tag = 'input window, operand 0, single buffered']
    #allocation3 [shape = 's32[1]{0}', space=sflag, size = 0x4, scoped, tag = 'scoped memory for tpu_custom_call.1']
    #allocation4 [shape = 'u8[1024]{0}', space=vmem, size = 0x400, scoped, tag = 'input window, operand 1, single buffered']
    #allocation5 [shape = 's32[1]{0}', space=sflag, size = 0x4, scoped, tag = 'scoped memory for tpu_custom_call.1']
    %7 = vsyncpa [#allocation3], 0
    %8 = vsyncpa [#allocation5], 0
    // Predicated region
    $region2: #{tpu_custom_call.1} parent=1 // pred_check
      _
    $region3: #{tpu_custom_call.1} parent=1 // pred_check_branch
      %10 = sbr.rel (0) target = $region5
    $region4: #{tpu_custom_call.1} parent=1 // pred_region
      %s12 = ssub.s32 256, 256
      %13 = vsyncadd [#allocation3], %s12
      %s15 = sshll.u32 [#allocation2], 4
      %s16 = int_to_ptr.vmem [resolvable:$true] %s15
      %18 = dma.hbm_to_vmem [thread:$0]  %s0, 256, %s16, [#allocation3]
    $region5: #{tpu_custom_call.1} parent=1 // pred_fallthru
      _
    // Predicated region
    $region6: #{tpu_custom_call.1} parent=1 // pred_check
      _
    $region7: #{tpu_custom_call.1} parent=1 // pred_check_branch
      %20 = sbr.rel (0) target = $region9
    $region8: #{tpu_custom_call.1} parent=1 // pred_region
      %s22 = ssub.s32 32, 32
      %23 = vsyncadd [#allocation5], %s22
      %s25 = sshll.u32 [#allocation4], 4
      %s26 = int_to_ptr.vmem [resolvable:$true] %s25
      %28 = dma.hbm_to_vmem [thread:$0]  %s1, 32, %s26, [#allocation5]
    $region9: #{tpu_custom_call.1} parent=1 // pred_fallthru
      _
    // Predicated region
    $region10: #{tpu_custom_call.1} parent=1 // pred_check
      _
    $region11: #{tpu_custom_call.1} parent=1 // pred_check_branch
      %30 = sbr.rel (0) target = $region13
    $region12: #{tpu_custom_call.1} parent=1 // pred_region
      %31 = dma.done [#allocation3], 256
    $region13: #{tpu_custom_call.1} parent=1 // pred_fallthru
      _
    // Predicated region
    $region14: #{tpu_custom_call.1} parent=1 // pred_check
      _
    $region15: #{tpu_custom_call.1} parent=1 // pred_check_branch
      %33 = sbr.rel (0) target = $region17
    $region16: #{tpu_custom_call.1} parent=1 // pred_region
      %34 = dma.done [#allocation5], 32
    $region17: #{tpu_custom_call.1} parent=1 // pred_fallthru
      _
    %v35 = vld [vmem:[#allocation2] sm:$0xff]
    %v36 = vld [vmem:[#allocation2 + $0x8] sm:$0xff]
    %v37 = vld [vmem:[#allocation4] sm:$0x3]
    %v40 = vcombine.high %v35, %v35
    %v42 = vunpack.c.l.s4 1983009808
    %v43 = vunpack.c.0.s8 %v42
    %v44 = vlaneseq
    %v45 = vshrl.u32 %v44, 7
    %v46 = vsub.s32 %v43, %v45
    %v47 = vrot.slane %v35, %v46
    %v49 = vunpack.c.l.s4 1983009808
    %v50 = vunpack.c.0.s8 %v49
    %v51 = vlaneseq
    %v52 = vshrl.u32 %v51, 7
    %v53 = vsub.s32 %v50, %v52
    %v54 = vrot.slane %v40, %v53
    %v55 = vcombine.high %v47, %v47
    %v56 = vcombine.high %v54, %v54
    %v57 = vcombine.high %v36, %v36
    %v59 = vunpack.c.l.s4 1983009808
    %v60 = vunpack.c.0.s8 %v59
    %v61 = vlaneseq
    %v62 = vshrl.u32 %v61, 7
    %v63 = vsub.s32 %v60, %v62
    %v64 = vrot.slane %v36, %v63
    %v66 = vunpack.c.l.s4 1983009808
    %v67 = vunpack.c.0.s8 %v66
    %v68 = vlaneseq
    %v69 = vshrl.u32 %v68, 7
    %v70 = vsub.s32 %v67, %v69
    %v71 = vrot.slane %v57, %v70
    %v72 = vcombine.high %v64, %v64
    %v73 = vcombine.high %v71, %v71
    %82 = vxpose.xlu0.b32.start [1/16] %v47, 128
    %83 = vxpose.xlu0.b32.cont [2/16] 0.0, 128
    %84 = vxpose.xlu0.b32.cont [3/16] 0.0, 128
    %85 = vxpose.xlu0.b32.cont [4/16] 0.0, 128
    %86 = vxpose.xlu0.b32.cont [5/16] 0.0, 128
    %87 = vxpose.xlu0.b32.cont [6/16] 0.0, 128
    %88 = vxpose.xlu0.b32.cont [7/16] 0.0, 128
    %89 = vxpose.xlu0.b32.cont [8/16] 0.0, 128
    %90 = vxpose.xlu0.b32.cont [9/16] 0.0, 128
    %91 = vxpose.xlu0.b32.cont [10/16] 0.0, 128
    %92 = vxpose.xlu0.b32.cont [11/16] 0.0, 128
    %93 = vxpose.xlu0.b32.cont [12/16] 0.0, 128
    %94 = vxpose.xlu0.b32.cont [13/16] 0.0, 128
    %95 = vxpose.xlu0.b32.cont [14/16] 0.0, 128
    %96 = vxpose.xlu0.b32.cont [15/16] 0.0, 128
    %97 = vxpose.xlu0.b32.end [16/16] 0.0, 128
    %v98 = vpop.trf.xlu0
    %v99 = vpop.trf.xlu0
    %v100 = vpop.trf.xlu0
    %v101 = vpop.trf.xlu0
    %v102 = vpop.trf.xlu0
    %v103 = vpop.trf.xlu0
    %v104 = vpop.trf.xlu0
    %v105 = vpop.trf.xlu0
    %v106 = vpop.trf.xlu0
    %v107 = vpop.trf.xlu0
    %v108 = vpop.trf.xlu0
    %v109 = vpop.trf.xlu0
    %v110 = vpop.trf.xlu0
    %v111 = vpop.trf.xlu0
    %v112 = vpop.trf.xlu0
    %v113 = vpop.trf.xlu0
    %114 = vxpose.xlu0.b32.start [1/16] %v55, 128
    %115 = vxpose.xlu0.b32.cont [2/16] 0.0, 128
    %116 = vxpose.xlu0.b32.cont [3/16] 0.0, 128
    %117 = vxpose.xlu0.b32.cont [4/16] 0.0, 128
    %118 = vxpose.xlu0.b32.cont [5/16] 0.0, 128
    %119 = vxpose.xlu0.b32.cont [6/16] 0.0, 128
    %120 = vxpose.xlu0.b32.cont [7/16] 0.0, 128
    %121 = vxpose.xlu0.b32.cont [8/16] 0.0, 128
    %122 = vxpose.xlu0.b32.cont [9/16] 0.0, 128
    %123 = vxpose.xlu0.b32.cont [10/16] 0.0, 128
    %124 = vxpose.xlu0.b32.cont [11/16] 0.0, 128
    %125 = vxpose.xlu0.b32.cont [12/16] 0.0, 128
    %126 = vxpose.xlu0.b32.cont [13/16] 0.0, 128
    %127 = vxpose.xlu0.b32.cont [14/16] 0.0, 128
    %128 = vxpose.xlu0.b32.cont [15/16] 0.0, 128
    %129 = vxpose.xlu0.b32.end [16/16] 0.0, 128
    %v130 = vpop.trf.xlu0
    %v131 = vpop.trf.xlu0
    %v132 = vpop.trf.xlu0
    %v133 = vpop.trf.xlu0
    %v134 = vpop.trf.xlu0
    %v135 = vpop.trf.xlu0
    %v136 = vpop.trf.xlu0
    %v137 = vpop.trf.xlu0
    %v138 = vpop.trf.xlu0
    %v139 = vpop.trf.xlu0
    %v140 = vpop.trf.xlu0
    %v141 = vpop.trf.xlu0
    %v142 = vpop.trf.xlu0
    %v143 = vpop.trf.xlu0
    %v144 = vpop.trf.xlu0
    %v145 = vpop.trf.xlu0
    %146 = vxpose.xlu0.b32.start [1/16] %v54, 128
    %147 = vxpose.xlu0.b32.cont [2/16] 0.0, 128
    %148 = vxpose.xlu0.b32.cont [3/16] 0.0, 128
    %149 = vxpose.xlu0.b32.cont [4/16] 0.0, 128
    %150 = vxpose.xlu0.b32.cont [5/16] 0.0, 128
    %151 = vxpose.xlu0.b32.cont [6/16] 0.0, 128
    %152 = vxpose.xlu0.b32.cont [7/16] 0.0, 128
    %153 = vxpose.xlu0.b32.cont [8/16] 0.0, 128
    %154 = vxpose.xlu0.b32.cont [9/16] 0.0, 128
    %155 = vxpose.xlu0.b32.cont [10/16] 0.0, 128
    %156 = vxpose.xlu0.b32.cont [11/16] 0.0, 128
    %157 = vxpose.xlu0.b32.cont [12/16] 0.0, 128
    %158 = vxpose.xlu0.b32.cont [13/16] 0.0, 128
    %159 = vxpose.xlu0.b32.cont [14/16] 0.0, 128
    %160 = vxpose.xlu0.b32.cont [15/16] 0.0, 128
    %161 = vxpose.xlu0.b32.end [16/16] 0.0, 128
    %v162 = vpop.trf.xlu0
    %v163 = vpop.trf.xlu0
    %v164 = vpop.trf.xlu0
    %v165 = vpop.trf.xlu0
    %v166 = vpop.trf.xlu0
    %v167 = vpop.trf.xlu0
    %v168 = vpop.trf.xlu0
    %v169 = vpop.trf.xlu0
    %v170 = vpop.trf.xlu0
    %v171 = vpop.trf.xlu0
    %v172 = vpop.trf.xlu0
    %v173 = vpop.trf.xlu0
    %v174 = vpop.trf.xlu0
    %v175 = vpop.trf.xlu0
    %v176 = vpop.trf.xlu0
    %v177 = vpop.trf.xlu0
    %178 = vxpose.xlu0.b32.start [1/16] %v56, 128
    %179 = vxpose.xlu0.b32.cont [2/16] 0.0, 128
    %180 = vxpose.xlu0.b32.cont [3/16] 0.0, 128
    %181 = vxpose.xlu0.b32.cont [4/16] 0.0, 128
    %182 = vxpose.xlu0.b32.cont [5/16] 0.0, 128
    %183 = vxpose.xlu0.b32.cont [6/16] 0.0, 128
    %184 = vxpose.xlu0.b32.cont [7/16] 0.0, 128
    %185 = vxpose.xlu0.b32.cont [8/16] 0.0, 128
    %186 = vxpose.xlu0.b32.cont [9/16] 0.0, 128
    %187 = vxpose.xlu0.b32.cont [10/16] 0.0, 128
    %188 = vxpose.xlu0.b32.cont [11/16] 0.0, 128
    %189 = vxpose.xlu0.b32.cont [12/16] 0.0, 128
    %190 = vxpose.xlu0.b32.cont [13/16] 0.0, 128
    %191 = vxpose.xlu0.b32.cont [14/16] 0.0, 128
    %192 = vxpose.xlu0.b32.cont [15/16] 0.0, 128
    %193 = vxpose.xlu0.b32.end [16/16] 0.0, 128
    %v194 = vpop.trf.xlu0
    %v195 = vpop.trf.xlu0
    %v196 = vpop.trf.xlu0
    %v197 = vpop.trf.xlu0
    %v198 = vpop.trf.xlu0
    %v199 = vpop.trf.xlu0
    %v200 = vpop.trf.xlu0
    %v201 = vpop.trf.xlu0
    %v202 = vpop.trf.xlu0
    %v203 = vpop.trf.xlu0
    %v204 = vpop.trf.xlu0
    %v205 = vpop.trf.xlu0
    %v206 = vpop.trf.xlu0
    %v207 = vpop.trf.xlu0
    %v208 = vpop.trf.xlu0
    %v209 = vpop.trf.xlu0
    %210 = vxpose.xlu0.b32.start [1/16] %v64, 128
    %211 = vxpose.xlu0.b32.cont [2/16] 0.0, 128
    %212 = vxpose.xlu0.b32.cont [3/16] 0.0, 128
    %213 = vxpose.xlu0.b32.cont [4/16] 0.0, 128
    %214 = vxpose.xlu0.b32.cont [5/16] 0.0, 128
    %215 = vxpose.xlu0.b32.cont [6/16] 0.0, 128
    %216 = vxpose.xlu0.b32.cont [7/16] 0.0, 128
    %217 = vxpose.xlu0.b32.cont [8/16] 0.0, 128
    %218 = vxpose.xlu0.b32.cont [9/16] 0.0, 128
    %219 = vxpose.xlu0.b32.cont [10/16] 0.0, 128
    %220 = vxpose.xlu0.b32.cont [11/16] 0.0, 128
    %221 = vxpose.xlu0.b32.cont [12/16] 0.0, 128
    %222 = vxpose.xlu0.b32.cont [13/16] 0.0, 128
    %223 = vxpose.xlu0.b32.cont [14/16] 0.0, 128
    %224 = vxpose.xlu0.b32.cont [15/16] 0.0, 128
    %225 = vxpose.xlu0.b32.end [16/16] 0.0, 128
    %v226 = vpop.trf.xlu0
    %v227 = vpop.trf.xlu0
    %v228 = vpop.trf.xlu0
    %v229 = vpop.trf.xlu0
    %v230 = vpop.trf.xlu0
    %v231 = vpop.trf.xlu0
    %v232 = vpop.trf.xlu0
    %v233 = vpop.trf.xlu0
    %v234 = vpop.trf.xlu0
    %v235 = vpop.trf.xlu0
    %v236 = vpop.trf.xlu0
    %v237 = vpop.trf.xlu0
    %v238 = vpop.trf.xlu0
    %v239 = vpop.trf.xlu0
    %v240 = vpop.trf.xlu0
    %v241 = vpop.trf.xlu0
    %242 = vxpose.xlu0.b32.start [1/16] %v72, 128
    %243 = vxpose.xlu0.b32.cont [2/16] 0.0, 128
    %244 = vxpose.xlu0.b32.cont [3/16] 0.0, 128
    %245 = vxpose.xlu0.b32.cont [4/16] 0.0, 128
    %246 = vxpose.xlu0.b32.cont [5/16] 0.0, 128
    %247 = vxpose.xlu0.b32.cont [6/16] 0.0, 128
    %248 = vxpose.xlu0.b32.cont [7/16] 0.0, 128
    %249 = vxpose.xlu0.b32.cont [8/16] 0.0, 128
    %250 = vxpose.xlu0.b32.cont [9/16] 0.0, 128
    %251 = vxpose.xlu0.b32.cont [10/16] 0.0, 128
    %252 = vxpose.xlu0.b32.cont [11/16] 0.0, 128
    %253 = vxpose.xlu0.b32.cont [12/16] 0.0, 128
    %254 = vxpose.xlu0.b32.cont [13/16] 0.0, 128
    %255 = vxpose.xlu0.b32.cont [14/16] 0.0, 128
    %256 = vxpose.xlu0.b32.cont [15/16] 0.0, 128
    %257 = vxpose.xlu0.b32.end [16/16] 0.0, 128
    %v258 = vpop.trf.xlu0
    %v259 = vpop.trf.xlu0
    %v260 = vpop.trf.xlu0
    %v261 = vpop.trf.xlu0
    %v262 = vpop.trf.xlu0
    %v263 = vpop.trf.xlu0
    %v264 = vpop.trf.xlu0
    %v265 = vpop.trf.xlu0
    %v266 = vpop.trf.xlu0
    %v267 = vpop.trf.xlu0
    %v268 = vpop.trf.xlu0
    %v269 = vpop.trf.xlu0
    %v270 = vpop.trf.xlu0
    %v271 = vpop.trf.xlu0
    %v272 = vpop.trf.xlu0
    %v273 = vpop.trf.xlu0
    %274 = vxpose.xlu0.b32.start [1/16] %v71, 128
    %275 = vxpose.xlu0.b32.cont [2/16] 0.0, 128
    %276 = vxpose.xlu0.b32.cont [3/16] 0.0, 128
    %277 = vxpose.xlu0.b32.cont [4/16] 0.0, 128
    %278 = vxpose.xlu0.b32.cont [5/16] 0.0, 128
    %279 = vxpose.xlu0.b32.cont [6/16] 0.0, 128
    %280 = vxpose.xlu0.b32.cont [7/16] 0.0, 128
    %281 = vxpose.xlu0.b32.cont [8/16] 0.0, 128
    %282 = vxpose.xlu0.b32.cont [9/16] 0.0, 128
    %283 = vxpose.xlu0.b32.cont [10/16] 0.0, 128
    %284 = vxpose.xlu0.b32.cont [11/16] 0.0, 128
    %285 = vxpose.xlu0.b32.cont [12/16] 0.0, 128
    %286 = vxpose.xlu0.b32.cont [13/16] 0.0, 128
    %287 = vxpose.xlu0.b32.cont [14/16] 0.0, 128
    %288 = vxpose.xlu0.b32.cont [15/16] 0.0, 128
    %289 = vxpose.xlu0.b32.end [16/16] 0.0, 128
    %v290 = vpop.trf.xlu0
    %v291 = vpop.trf.xlu0
    %v292 = vpop.trf.xlu0
    %v293 = vpop.trf.xlu0
    %v294 = vpop.trf.xlu0
    %v295 = vpop.trf.xlu0
    %v296 = vpop.trf.xlu0
    %v297 = vpop.trf.xlu0
    %v298 = vpop.trf.xlu0
    %v299 = vpop.trf.xlu0
    %v300 = vpop.trf.xlu0
    %v301 = vpop.trf.xlu0
    %v302 = vpop.trf.xlu0
    %v303 = vpop.trf.xlu0
    %v304 = vpop.trf.xlu0
    %v305 = vpop.trf.xlu0
    %306 = vxpose.xlu0.b32.start [1/16] %v73, 128
    %307 = vxpose.xlu0.b32.cont [2/16] 0.0, 128
    %308 = vxpose.xlu0.b32.cont [3/16] 0.0, 128
    %309 = vxpose.xlu0.b32.cont [4/16] 0.0, 128
    %310 = vxpose.xlu0.b32.cont [5/16] 0.0, 128
    %311 = vxpose.xlu0.b32.cont [6/16] 0.0, 128
    %312 = vxpose.xlu0.b32.cont [7/16] 0.0, 128
    %313 = vxpose.xlu0.b32.cont [8/16] 0.0, 128
    %314 = vxpose.xlu0.b32.cont [9/16] 0.0, 128
    %315 = vxpose.xlu0.b32.cont [10/16] 0.0, 128
    %316 = vxpose.xlu0.b32.cont [11/16] 0.0, 128
    %317 = vxpose.xlu0.b32.cont [12/16] 0.0, 128
    %318 = vxpose.xlu0.b32.cont [13/16] 0.0, 128
    %319 = vxpose.xlu0.b32.cont [14/16] 0.0, 128
    %320 = vxpose.xlu0.b32.cont [15/16] 0.0, 128
    %321 = vxpose.xlu0.b32.end [16/16] 0.0, 128
    %v322 = vpop.trf.xlu0
    %v323 = vpop.trf.xlu0
    %v324 = vpop.trf.xlu0
    %v325 = vpop.trf.xlu0
    %v326 = vpop.trf.xlu0
    %v327 = vpop.trf.xlu0
    %v328 = vpop.trf.xlu0
    %v329 = vpop.trf.xlu0
    %v330 = vpop.trf.xlu0
    %v331 = vpop.trf.xlu0
    %v332 = vpop.trf.xlu0
    %v333 = vpop.trf.xlu0
    %v334 = vpop.trf.xlu0
    %v335 = vpop.trf.xlu0
    %v336 = vpop.trf.xlu0
    %v337 = vpop.trf.xlu0
    %vm338 = vcmask 15360
    %v340 = vsel %vm338, %v98, 0
    %v343 = vsel %vm338, %v99, 0
    %v346 = vsel %vm338, %v100, 0
    %v349 = vsel %vm338, %v101, 0
    %v352 = vsel %vm338, %v102, 0
    %v355 = vsel %vm338, %v103, 0
    %v358 = vsel %vm338, %v104, 0
    %v361 = vsel %vm338, %v105, 0
    %v364 = vsel %vm338, %v106, 0
    %v367 = vsel %vm338, %v107, 0
    %v370 = vsel %vm338, %v108, 0
    %v373 = vsel %vm338, %v109, 0
    %v376 = vsel %vm338, %v110, 0
    %v379 = vsel %vm338, %v111, 0
    %v382 = vsel %vm338, %v112, 0
    %v385 = vsel %vm338, %v113, 0
    %v388 = vsel %vm338, %v130, 0
    %v391 = vsel %vm338, %v131, 0
    %v394 = vsel %vm338, %v132, 0
    %v397 = vsel %vm338, %v133, 0
    %v400 = vsel %vm338, %v134, 0
    %v403 = vsel %vm338, %v135, 0
    %v406 = vsel %vm338, %v136, 0
    %v409 = vsel %vm338, %v137, 0
    %v412 = vsel %vm338, %v138, 0
    %v415 = vsel %vm338, %v139, 0
    %v418 = vsel %vm338, %v140, 0
    %v421 = vsel %vm338, %v141, 0
    %v424 = vsel %vm338, %v142, 0
    %v427 = vsel %vm338, %v143, 0
    %v430 = vsel %vm338, %v144, 0
    %v433 = vsel %vm338, %v145, 0
    %v436 = vsel %vm338, %v162, 0
    %v439 = vsel %vm338, %v163, 0
    %v442 = vsel %vm338, %v164, 0
    %v445 = vsel %vm338, %v165, 0
    %v448 = vsel %vm338, %v166, 0
    %v451 = vsel %vm338, %v167, 0
    %v454 = vsel %vm338, %v168, 0
    %v457 = vsel %vm338, %v169, 0
    %v460 = vsel %vm338, %v170, 0
    %v463 = vsel %vm338, %v171, 0
    %v466 = vsel %vm338, %v172, 0
    %v469 = vsel %vm338, %v173, 0
    %v472 = vsel %vm338, %v174, 0
    %v475 = vsel %vm338, %v175, 0
    %v478 = vsel %vm338, %v176, 0
    %v481 = vsel %vm338, %v177, 0
    %v484 = vsel %vm338, %v194, 0
    %v487 = vsel %vm338, %v195, 0
    %v490 = vsel %vm338, %v196, 0
    %v493 = vsel %vm338, %v197, 0
    %v496 = vsel %vm338, %v198, 0
    %v499 = vsel %vm338, %v199, 0
    %v502 = vsel %vm338, %v200, 0
    %v505 = vsel %vm338, %v201, 0
    %v508 = vsel %vm338, %v202, 0
    %v511 = vsel %vm338, %v203, 0
    %v514 = vsel %vm338, %v204, 0
    %v517 = vsel %vm338, %v205, 0
    %v520 = vsel %vm338, %v206, 0
    %v523 = vsel %vm338, %v207, 0
    %v526 = vsel %vm338, %v208, 0
    %v529 = vsel %vm338, %v209, 0
    %v532 = vsel %vm338, %v226, 0
    %v535 = vsel %vm338, %v227, 0
    %v538 = vsel %vm338, %v228, 0
    %v541 = vsel %vm338, %v229, 0
    %v544 = vsel %vm338, %v230, 0
    %v547 = vsel %vm338, %v231, 0
    %v550 = vsel %vm338, %v232, 0
    %v553 = vsel %vm338, %v233, 0
    %v556 = vsel %vm338, %v234, 0
    %v559 = vsel %vm338, %v235, 0
    %v562 = vsel %vm338, %v236, 0
    %v565 = vsel %vm338, %v237, 0
    %v568 = vsel %vm338, %v238, 0
    %v571 = vsel %vm338, %v239, 0
    %v574 = vsel %vm338, %v240, 0
    %v577 = vsel %vm338, %v241, 0
    %v580 = vsel %vm338, %v258, 0
    %v583 = vsel %vm338, %v259, 0
    %v586 = vsel %vm338, %v260, 0
    %v589 = vsel %vm338, %v261, 0
    %v592 = vsel %vm338, %v262, 0
    %v595 = vsel %vm338, %v263, 0
    %v598 = vsel %vm338, %v264, 0
    %v601 = vsel %vm338, %v265, 0
    %v604 = vsel %vm338, %v266, 0
    %v607 = vsel %vm338, %v267, 0
    %v610 = vsel %vm338, %v268, 0
    %v613 = vsel %vm338, %v269, 0
    %v616 = vsel %vm338, %v270, 0
    %v619 = vsel %vm338, %v271, 0
    %v622 = vsel %vm338, %v272, 0
    %v625 = vsel %vm338, %v273, 0
    %v628 = vsel %vm338, %v290, 0
    %v631 = vsel %vm338, %v291, 0
    %v634 = vsel %vm338, %v292, 0
    %v637 = vsel %vm338, %v293, 0
    %v640 = vsel %vm338, %v294, 0
    %v643 = vsel %vm338, %v295, 0
    %v646 = vsel %vm338, %v296, 0
    %v649 = vsel %vm338, %v297, 0
    %v652 = vsel %vm338, %v298, 0
    %v655 = vsel %vm338, %v299, 0
    %v658 = vsel %vm338, %v300, 0
    %v661 = vsel %vm338, %v301, 0
    %v664 = vsel %vm338, %v302, 0
    %v667 = vsel %vm338, %v303, 0
    %v670 = vsel %vm338, %v304, 0
    %v673 = vsel %vm338, %v305, 0
    %v676 = vsel %vm338, %v322, 0
    %v679 = vsel %vm338, %v323, 0
    %v682 = vsel %vm338, %v324, 0
    %v685 = vsel %vm338, %v325, 0
    %v688 = vsel %vm338, %v326, 0
    %v691 = vsel %vm338, %v327, 0
    %v694 = vsel %vm338, %v328, 0
    %v697 = vsel %vm338, %v329, 0
    %v700 = vsel %vm338, %v330, 0
    %v703 = vsel %vm338, %v331, 0
    %v706 = vsel %vm338, %v332, 0
    %v709 = vsel %vm338, %v333, 0
    %v712 = vsel %vm338, %v334, 0
    %v715 = vsel %vm338, %v335, 0
    %v718 = vsel %vm338, %v336, 0
    %v721 = vsel %vm338, %v337, 0
    %vm723 = vcmask 1041408
    %v725 = vsel %vm723, %v37, 0
    %727 = vmatprep.subr.mxu0 0.0
    %728 = vmatpush1.msra.mxu0 0.0
    %729 = vmatprep.subr.mxu0 0.0
    %730 = vmatpush1.msra.mxu0 0.0
    %731 = vmatprep.subr.mxu0 0.0
    %732 = vmatpush1.msra.mxu0 0.0
    %733 = vmatprep.subr.mxu0 0.0
    %734 = vmatpush1.msra.mxu0 0.0
    %735 = vmatprep.subr.mxu0 0.0
    %736 = vmatpush1.msra.mxu0 0.0
    %737 = vmatprep.subr.mxu0 0.0
    %738 = vmatpush1.msra.mxu0 0.0
    %739 = vmatprep.subr.mxu0 0.0
    %740 = vmatpush1.msra.mxu0 0.0
    %741 = vmatprep.subr.mxu0 0.0
    %742 = vmatpush1.msra.mxu0 0.0
    %743 = vmatprep.subr.mxu0 0.0
    %744 = vmatpush1.msra.mxu0 0.0
    %745 = vmatprep.subr.mxu0 0.0
    %746 = vmatpush1.msra.mxu0 0.0
    %747 = vmatprep.subr.mxu0 0.0
    %748 = vmatpush1.msra.mxu0 0.0
    %749 = vmatprep.subr.mxu0 0.0
    %750 = vmatpush1.msra.mxu0 0.0
    %751 = vmatprep.subr.mxu0 0.0
    %752 = vmatpush1.msra.mxu0 0.0
    %753 = vmatprep.subr.mxu0 0.0
    %754 = vmatpush1.msra.mxu0 0.0
    %755 = vmatprep.subr.mxu0 0.0
    %756 = vmatpush1.msra.mxu0 0.0
    %757 = vmatprep.subr.mxu0 0.0
    %758 = vmatpush1.msra.mxu0 %v725
    %759 = vmatprep.subr.mxu0 0.0
    %760 = vmatpush2.msra.mxu0 0.0
    %761 = vmatprep.subr.mxu0 0.0
    %762 = vmatpush2.msra.mxu0 0.0
    %763 = vmatprep.subr.mxu0 0.0
    %764 = vmatpush2.msra.mxu0 0.0
    %765 = vmatprep.subr.mxu0 0.0
    %766 = vmatpush2.msra.mxu0 0.0
    %767 = vmatprep.subr.mxu0 0.0
    %768 = vmatpush2.msra.mxu0 0.0
    %769 = vmatprep.subr.mxu0 0.0
    %770 = vmatpush2.msra.mxu0 0.0
    %771 = vmatprep.subr.mxu0 0.0
    %772 = vmatpush2.msra.mxu0 0.0
    %773 = vmatprep.subr.mxu0 0.0
    %774 = vmatpush2.msra.mxu0 0.0
    %775 = vmatprep.subr.mxu0 0.0
    %776 = vmatpush2.msra.mxu0 0.0
    %777 = vmatprep.subr.mxu0 0.0
    %778 = vmatpush2.msra.mxu0 0.0
    %779 = vmatprep.subr.mxu0 0.0
    %780 = vmatpush2.msra.mxu0 0.0
    %781 = vmatprep.subr.mxu0 0.0
    %782 = vmatpush2.msra.mxu0 0.0
    %783 = vmatprep.subr.mxu0 0.0
    %784 = vmatpush2.msra.mxu0 0.0
    %785 = vmatprep.subr.mxu0 0.0
    %786 = vmatpush2.msra.mxu0 0.0
    %787 = vmatprep.subr.mxu0 0.0
    %788 = vmatpush2.msra.mxu0 0.0
    %789 = vmatprep.subr.mxu0 0.0
    %790 = vmatpush2.msra.mxu0 0.0
    %791 = vmatprep.mubr.f32.mxu0 0.0
    %792 = vmatmul.mubr.f32.gmra.mxu0 %v340
    %v793 = vpop.f32.mrf.mxu0
    %v794 = vadd.f32 0.0, %v793
    %v795 = vpop.f32.mrf.mxu0
    %796 = vmatprep.mubr.f32.mxu0 0.0
    %797 = vmatmul.mubr.f32.gmra.mxu0 %v343
    %v798 = vpop.f32.mrf.mxu0
    %v799 = vadd.f32 0.0, %v798
    %v800 = vpop.f32.mrf.mxu0
    %801 = vmatprep.mubr.f32.mxu0 0.0
    %802 = vmatmul.mubr.f32.gmra.mxu0 %v346
    %v803 = vpop.f32.mrf.mxu0
    %v804 = vadd.f32 0.0, %v803
    %v805 = vpop.f32.mrf.mxu0
    %806 = vmatprep.mubr.f32.mxu0 0.0
    %807 = vmatmul.mubr.f32.gmra.mxu0 %v349
    %v808 = vpop.f32.mrf.mxu0
    %v809 = vadd.f32 0.0, %v808
    %v810 = vpop.f32.mrf.mxu0
    %811 = vmatprep.mubr.f32.mxu0 0.0
    %812 = vmatmul.mubr.f32.gmra.mxu0 %v352
    %v813 = vpop.f32.mrf.mxu0
    %v814 = vadd.f32 0.0, %v813
    %v815 = vpop.f32.mrf.mxu0
    %816 = vmatprep.mubr.f32.mxu0 0.0
    %817 = vmatmul.mubr.f32.gmra.mxu0 %v355
    %v818 = vpop.f32.mrf.mxu0
    %v819 = vadd.f32 0.0, %v818
    %v820 = vpop.f32.mrf.mxu0
    %821 = vmatprep.mubr.f32.mxu0 0.0
    %822 = vmatmul.mubr.f32.gmra.mxu0 %v358
    %v823 = vpop.f32.mrf.mxu0
    %v824 = vadd.f32 0.0, %v823
    %v825 = vpop.f32.mrf.mxu0
    %826 = vmatprep.mubr.f32.mxu0 0.0
    %827 = vmatmul.mubr.f32.gmra.mxu0 %v361
    %v828 = vpop.f32.mrf.mxu0
    %v829 = vadd.f32 0.0, %v828
    %v830 = vpop.f32.mrf.mxu0
    %831 = vmatprep.mubr.f32.mxu0 0.0
    %832 = vmatmul.mubr.f32.gmra.mxu0 %v364
    %v833 = vpop.f32.mrf.mxu0
    %v834 = vadd.f32 0.0, %v833
    %v835 = vpop.f32.mrf.mxu0
    %836 = vmatprep.mubr.f32.mxu0 0.0
    %837 = vmatmul.mubr.f32.gmra.mxu0 %v367
    %v838 = vpop.f32.mrf.mxu0
    %v839 = vadd.f32 0.0, %v838
    %v840 = vpop.f32.mrf.mxu0
    %841 = vmatprep.mubr.f32.mxu0 0.0
    %842 = vmatmul.mubr.f32.gmra.mxu0 %v370
    %v843 = vpop.f32.mrf.mxu0
    %v844 = vadd.f32 0.0, %v843
    %v845 = vpop.f32.mrf.mxu0
    %846 = vmatprep.mubr.f32.mxu0 0.0
    %847 = vmatmul.mubr.f32.gmra.mxu0 %v373
    %v848 = vpop.f32.mrf.mxu0
    %v849 = vadd.f32 0.0, %v848
    %v850 = vpop.f32.mrf.mxu0
    %851 = vmatprep.mubr.f32.mxu0 0.0
    %852 = vmatmul.mubr.f32.gmra.mxu0 %v376
    %v853 = vpop.f32.mrf.mxu0
    %v854 = vadd.f32 0.0, %v853
    %v855 = vpop.f32.mrf.mxu0
    %856 = vmatprep.mubr.f32.mxu0 0.0
    %857 = vmatmul.mubr.f32.gmra.mxu0 %v379
    %v858 = vpop.f32.mrf.mxu0
    %v859 = vadd.f32 0.0, %v858
    %v860 = vpop.f32.mrf.mxu0
    %861 = vmatprep.mubr.f32.mxu0 0.0
    %862 = vmatmul.mubr.f32.gmra.mxu0 %v382
    %v863 = vpop.f32.mrf.mxu0
    %v864 = vadd.f32 0.0, %v863
    %v865 = vpop.f32.mrf.mxu0
    %866 = vmatprep.mubr.f32.mxu0 0.0
    %867 = vmatmul.mubr.f32.gmra.mxu0 %v385
    %v868 = vpop.f32.mrf.mxu0
    %v869 = vadd.f32 0.0, %v868
    %v870 = vpop.f32.mrf.mxu0
    %871 = vmatprep.mubr.f32.mxu0 0.0
    %872 = vmatmul.mubr.f32.gmra.mxu0 %v388
    %v873 = vpop.f32.mrf.mxu0
    %v874 = vadd.f32 0.0, %v873
    %v875 = vpop.f32.mrf.mxu0
    %876 = vmatprep.mubr.f32.mxu0 0.0
    %877 = vmatmul.mubr.f32.gmra.mxu0 %v391
    %v878 = vpop.f32.mrf.mxu0
    %v879 = vadd.f32 0.0, %v878
    %v880 = vpop.f32.mrf.mxu0
    %881 = vmatprep.mubr.f32.mxu0 0.0
    %882 = vmatmul.mubr.f32.gmra.mxu0 %v394
    %v883 = vpop.f32.mrf.mxu0
    %v884 = vadd.f32 0.0, %v883
    %v885 = vpop.f32.mrf.mxu0
    %886 = vmatprep.mubr.f32.mxu0 0.0
    %887 = vmatmul.mubr.f32.gmra.mxu0 %v397
    %v888 = vpop.f32.mrf.mxu0
    %v889 = vadd.f32 0.0, %v888
    %v890 = vpop.f32.mrf.mxu0
    %891 = vmatprep.mubr.f32.mxu0 0.0
    %892 = vmatmul.mubr.f32.gmra.mxu0 %v400
    %v893 = vpop.f32.mrf.mxu0
    %v894 = vadd.f32 0.0, %v893
    %v895 = vpop.f32.mrf.mxu0
    %896 = vmatprep.mubr.f32.mxu0 0.0
    %897 = vmatmul.mubr.f32.gmra.mxu0 %v403
    %v898 = vpop.f32.mrf.mxu0
    %v899 = vadd.f32 0.0, %v898
    %v900 = vpop.f32.mrf.mxu0
    %901 = vmatprep.mubr.f32.mxu0 0.0
    %902 = vmatmul.mubr.f32.gmra.mxu0 %v406
    %v903 = vpop.f32.mrf.mxu0
    %v904 = vadd.f32 0.0, %v903
    %v905 = vpop.f32.mrf.mxu0
    %906 = vmatprep.mubr.f32.mxu0 0.0
    %907 = vmatmul.mubr.f32.gmra.mxu0 %v409
    %v908 = vpop.f32.mrf.mxu0
    %v909 = vadd.f32 0.0, %v908
    %v910 = vpop.f32.mrf.mxu0
    %911 = vmatprep.mubr.f32.mxu0 0.0
    %912 = vmatmul.mubr.f32.gmra.mxu0 %v412
    %v913 = vpop.f32.mrf.mxu0
    %v914 = vadd.f32 0.0, %v913
    %v915 = vpop.f32.mrf.mxu0
    %916 = vmatprep.mubr.f32.mxu0 0.0
    %917 = vmatmul.mubr.f32.gmra.mxu0 %v415
    %v918 = vpop.f32.mrf.mxu0
    %v919 = vadd.f32 0.0, %v918
    %v920 = vpop.f32.mrf.mxu0
    %921 = vmatprep.mubr.f32.mxu0 0.0
    %922 = vmatmul.mubr.f32.gmra.mxu0 %v418
    %v923 = vpop.f32.mrf.mxu0
    %v924 = vadd.f32 0.0, %v923
    %v925 = vpop.f32.mrf.mxu0
    %926 = vmatprep.mubr.f32.mxu0 0.0
    %927 = vmatmul.mubr.f32.gmra.mxu0 %v421
    %v928 = vpop.f32.mrf.mxu0
    %v929 = vadd.f32 0.0, %v928
    %v930 = vpop.f32.mrf.mxu0
    %931 = vmatprep.mubr.f32.mxu0 0.0
    %932 = vmatmul.mubr.f32.gmra.mxu0 %v424
    %v933 = vpop.f32.mrf.mxu0
    %v934 = vadd.f32 0.0, %v933
    %v935 = vpop.f32.mrf.mxu0
    %936 = vmatprep.mubr.f32.mxu0 0.0
    %937 = vmatmul.mubr.f32.gmra.mxu0 %v427
    %v938 = vpop.f32.mrf.mxu0
    %v939 = vadd.f32 0.0, %v938
    %v940 = vpop.f32.mrf.mxu0
    %941 = vmatprep.mubr.f32.mxu0 0.0
    %942 = vmatmul.mubr.f32.gmra.mxu0 %v430
    %v943 = vpop.f32.mrf.mxu0
    %v944 = vadd.f32 0.0, %v943
    %v945 = vpop.f32.mrf.mxu0
    %946 = vmatprep.mubr.f32.mxu0 0.0
    %947 = vmatmul.mubr.f32.gmra.mxu0 %v433
    %v948 = vpop.f32.mrf.mxu0
    %v949 = vadd.f32 0.0, %v948
    %v950 = vpop.f32.mrf.mxu0
    %951 = vmatprep.mubr.f32.mxu0 0.0
    %952 = vmatmul.mubr.f32.gmra.mxu0 %v436
    %v953 = vpop.f32.mrf.mxu0
    %v954 = vadd.f32 0.0, %v953
    %v955 = vpop.f32.mrf.mxu0
    %956 = vmatprep.mubr.f32.mxu0 0.0
    %957 = vmatmul.mubr.f32.gmra.mxu0 %v439
    %v958 = vpop.f32.mrf.mxu0
    %v959 = vadd.f32 0.0, %v958
    %v960 = vpop.f32.mrf.mxu0
    %961 = vmatprep.mubr.f32.mxu0 0.0
    %962 = vmatmul.mubr.f32.gmra.mxu0 %v442
    %v963 = vpop.f32.mrf.mxu0
    %v964 = vadd.f32 0.0, %v963
    %v965 = vpop.f32.mrf.mxu0
    %966 = vmatprep.mubr.f32.mxu0 0.0
    %967 = vmatmul.mubr.f32.gmra.mxu0 %v445
    %v968 = vpop.f32.mrf.mxu0
    %v969 = vadd.f32 0.0, %v968
    %v970 = vpop.f32.mrf.mxu0
    %971 = vmatprep.mubr.f32.mxu0 0.0
    %972 = vmatmul.mubr.f32.gmra.mxu0 %v448
    %v973 = vpop.f32.mrf.mxu0
    %v974 = vadd.f32 0.0, %v973
    %v975 = vpop.f32.mrf.mxu0
    %976 = vmatprep.mubr.f32.mxu0 0.0
    %977 = vmatmul.mubr.f32.gmra.mxu0 %v451
    %v978 = vpop.f32.mrf.mxu0
    %v979 = vadd.f32 0.0, %v978
    %v980 = vpop.f32.mrf.mxu0
    %981 = vmatprep.mubr.f32.mxu0 0.0
    %982 = vmatmul.mubr.f32.gmra.mxu0 %v454
    %v983 = vpop.f32.mrf.mxu0
    %v984 = vadd.f32 0.0, %v983
    %v985 = vpop.f32.mrf.mxu0
    %986 = vmatprep.mubr.f32.mxu0 0.0
    %987 = vmatmul.mubr.f32.gmra.mxu0 %v457
    %v988 = vpop.f32.mrf.mxu0
    %v989 = vadd.f32 0.0, %v988
    %v990 = vpop.f32.mrf.mxu0
    %991 = vmatprep.mubr.f32.mxu0 0.0
    %992 = vmatmul.mubr.f32.gmra.mxu0 %v460
    %v993 = vpop.f32.mrf.mxu0
    %v994 = vadd.f32 0.0, %v993
    %v995 = vpop.f32.mrf.mxu0
    %996 = vmatprep.mubr.f32.mxu0 0.0
    %997 = vmatmul.mubr.f32.gmra.mxu0 %v463
    %v998 = vpop.f32.mrf.mxu0
    %v999 = vadd.f32 0.0, %v998
    %v1000 = vpop.f32.mrf.mxu0
    %1001 = vmatprep.mubr.f32.mxu0 0.0
    %1002 = vmatmul.mubr.f32.gmra.mxu0 %v466
    %v1003 = vpop.f32.mrf.mxu0
    %v1004 = vadd.f32 0.0, %v1003
    %v1005 = vpop.f32.mrf.mxu0
    %1006 = vmatprep.mubr.f32.mxu0 0.0
    %1007 = vmatmul.mubr.f32.gmra.mxu0 %v469
    %v1008 = vpop.f32.mrf.mxu0
    %v1009 = vadd.f32 0.0, %v1008
    %v1010 = vpop.f32.mrf.mxu0
    %1011 = vmatprep.mubr.f32.mxu0 0.0
    %1012 = vmatmul.mubr.f32.gmra.mxu0 %v472
    %v1013 = vpop.f32.mrf.mxu0
    %v1014 = vadd.f32 0.0, %v1013
    %v1015 = vpop.f32.mrf.mxu0
    %1016 = vmatprep.mubr.f32.mxu0 0.0
    %1017 = vmatmul.mubr.f32.gmra.mxu0 %v475
    %v1018 = vpop.f32.mrf.mxu0
    %v1019 = vadd.f32 0.0, %v1018
    %v1020 = vpop.f32.mrf.mxu0
    %1021 = vmatprep.mubr.f32.mxu0 0.0
    %1022 = vmatmul.mubr.f32.gmra.mxu0 %v478
    %v1023 = vpop.f32.mrf.mxu0
    %v1024 = vadd.f32 0.0, %v1023
    %v1025 = vpop.f32.mrf.mxu0
    %1026 = vmatprep.mubr.f32.mxu0 0.0
    %1027 = vmatmul.mubr.f32.gmra.mxu0 %v481
    %v1028 = vpop.f32.mrf.mxu0
    %v1029 = vadd.f32 0.0, %v1028
    %v1030 = vpop.f32.mrf.mxu0
    %1031 = vmatprep.mubr.f32.mxu0 0.0
    %1032 = vmatmul.mubr.f32.gmra.mxu0 %v484
    %v1033 = vpop.f32.mrf.mxu0
    %v1034 = vadd.f32 0.0, %v1033
    %v1035 = vpop.f32.mrf.mxu0
    %1036 = vmatprep.mubr.f32.mxu0 0.0
    %1037 = vmatmul.mubr.f32.gmra.mxu0 %v487
    %v1038 = vpop.f32.mrf.mxu0
    %v1039 = vadd.f32 0.0, %v1038
    %v1040 = vpop.f32.mrf.mxu0
    %1041 = vmatprep.mubr.f32.mxu0 0.0
    %1042 = vmatmul.mubr.f32.gmra.mxu0 %v490
    %v1043 = vpop.f32.mrf.mxu0
    %v1044 = vadd.f32 0.0, %v1043
    %v1045 = vpop.f32.mrf.mxu0
    %1046 = vmatprep.mubr.f32.mxu0 0.0
    %1047 = vmatmul.mubr.f32.gmra.mxu0 %v493
    %v1048 = vpop.f32.mrf.mxu0
    %v1049 = vadd.f32 0.0, %v1048
    %v1050 = vpop.f32.mrf.mxu0
    %1051 = vmatprep.mubr.f32.mxu0 0.0
    %1052 = vmatmul.mubr.f32.gmra.mxu0 %v496
    %v1053 = vpop.f32.mrf.mxu0
    %v1054 = vadd.f32 0.0, %v1053
    %v1055 = vpop.f32.mrf.mxu0
    %1056 = vmatprep.mubr.f32.mxu0 0.0
    %1057 = vmatmul.mubr.f32.gmra.mxu0 %v499
    %v1058 = vpop.f32.mrf.mxu0
    %v1059 = vadd.f32 0.0, %v1058
    %v1060 = vpop.f32.mrf.mxu0
    %1061 = vmatprep.mubr.f32.mxu0 0.0
    %1062 = vmatmul.mubr.f32.gmra.mxu0 %v502
    %v1063 = vpop.f32.mrf.mxu0
    %v1064 = vadd.f32 0.0, %v1063
    %v1065 = vpop.f32.mrf.mxu0
    %1066 = vmatprep.mubr.f32.mxu0 0.0
    %1067 = vmatmul.mubr.f32.gmra.mxu0 %v505
    %v1068 = vpop.f32.mrf.mxu0
    %v1069 = vadd.f32 0.0, %v1068
    %v1070 = vpop.f32.mrf.mxu0
    %1071 = vmatprep.mubr.f32.mxu0 0.0
    %1072 = vmatmul.mubr.f32.gmra.mxu0 %v508
    %v1073 = vpop.f32.mrf.mxu0
    %v1074 = vadd.f32 0.0, %v1073
    %v1075 = vpop.f32.mrf.mxu0
    %1076 = vmatprep.mubr.f32.mxu0 0.0
    %1077 = vmatmul.mubr.f32.gmra.mxu0 %v511
    %v1078 = vpop.f32.mrf.mxu0
    %v1079 = vadd.f32 0.0, %v1078
    %v1080 = vpop.f32.mrf.mxu0
    %1081 = vmatprep.mubr.f32.mxu0 0.0
    %1082 = vmatmul.mubr.f32.gmra.mxu0 %v514
    %v1083 = vpop.f32.mrf.mxu0
    %v1084 = vadd.f32 0.0, %v1083
    %v1085 = vpop.f32.mrf.mxu0
    %1086 = vmatprep.mubr.f32.mxu0 0.0
    %1087 = vmatmul.mubr.f32.gmra.mxu0 %v517
    %v1088 = vpop.f32.mrf.mxu0
    %v1089 = vadd.f32 0.0, %v1088
    %v1090 = vpop.f32.mrf.mxu0
    %1091 = vmatprep.mubr.f32.mxu0 0.0
    %1092 = vmatmul.mubr.f32.gmra.mxu0 %v520
    %v1093 = vpop.f32.mrf.mxu0
    %v1094 = vadd.f32 0.0, %v1093
    %v1095 = vpop.f32.mrf.mxu0
    %1096 = vmatprep.mubr.f32.mxu0 0.0
    %1097 = vmatmul.mubr.f32.gmra.mxu0 %v523
    %v1098 = vpop.f32.mrf.mxu0
    %v1099 = vadd.f32 0.0, %v1098
    %v1100 = vpop.f32.mrf.mxu0
    %1101 = vmatprep.mubr.f32.mxu0 0.0
    %1102 = vmatmul.mubr.f32.gmra.mxu0 %v526
    %v1103 = vpop.f32.mrf.mxu0
    %v1104 = vadd.f32 0.0, %v1103
    %v1105 = vpop.f32.mrf.mxu0
    %1106 = vmatprep.mubr.f32.mxu0 0.0
    %1107 = vmatmul.mubr.f32.gmra.mxu0 %v529
    %v1108 = vpop.f32.mrf.mxu0
    %v1109 = vadd.f32 0.0, %v1108
    %v1110 = vpop.f32.mrf.mxu0
    %1111 = vmatprep.mubr.f32.mxu0 0.0
    %1112 = vmatmul.mubr.f32.gmra.mxu0 %v532
    %v1113 = vpop.f32.mrf.mxu0
    %v1114 = vadd.f32 0.0, %v1113
    %v1115 = vpop.f32.mrf.mxu0
    %1116 = vmatprep.mubr.f32.mxu0 0.0
    %1117 = vmatmul.mubr.f32.gmra.mxu0 %v535
    %v1118 = vpop.f32.mrf.mxu0
    %v1119 = vadd.f32 0.0, %v1118
    %v1120 = vpop.f32.mrf.mxu0
    %1121 = vmatprep.mubr.f32.mxu0 0.0
    %1122 = vmatmul.mubr.f32.gmra.mxu0 %v538
    %v1123 = vpop.f32.mrf.mxu0
    %v1124 = vadd.f32 0.0, %v1123
    %v1125 = vpop.f32.mrf.mxu0
    %1126 = vmatprep.mubr.f32.mxu0 0.0
    %1127 = vmatmul.mubr.f32.gmra.mxu0 %v541
    %v1128 = vpop.f32.mrf.mxu0
    %v1129 = vadd.f32 0.0, %v1128
    %v1130 = vpop.f32.mrf.mxu0
    %1131 = vmatprep.mubr.f32.mxu0 0.0
    %1132 = vmatmul.mubr.f32.gmra.mxu0 %v544
    %v1133 = vpop.f32.mrf.mxu0
    %v1134 = vadd.f32 0.0, %v1133
    %v1135 = vpop.f32.mrf.mxu0
    %1136 = vmatprep.mubr.f32.mxu0 0.0
    %1137 = vmatmul.mubr.f32.gmra.mxu0 %v547
    %v1138 = vpop.f32.mrf.mxu0
    %v1139 = vadd.f32 0.0, %v1138
    %v1140 = vpop.f32.mrf.mxu0
    %1141 = vmatprep.mubr.f32.mxu0 0.0
    %1142 = vmatmul.mubr.f32.gmra.mxu0 %v550
    %v1143 = vpop.f32.mrf.mxu0
    %v1144 = vadd.f32 0.0, %v1143
    %v1145 = vpop.f32.mrf.mxu0
    %1146 = vmatprep.mubr.f32.mxu0 0.0
    %1147 = vmatmul.mubr.f32.gmra.mxu0 %v553
    %v1148 = vpop.f32.mrf.mxu0
    %v1149 = vadd.f32 0.0, %v1148
    %v1150 = vpop.f32.mrf.mxu0
    %1151 = vmatprep.mubr.f32.mxu0 0.0
    %1152 = vmatmul.mubr.f32.gmra.mxu0 %v556
    %v1153 = vpop.f32.mrf.mxu0
    %v1154 = vadd.f32 0.0, %v1153
    %v1155 = vpop.f32.mrf.mxu0
    %1156 = vmatprep.mubr.f32.mxu0 0.0
    %1157 = vmatmul.mubr.f32.gmra.mxu0 %v559
    %v1158 = vpop.f32.mrf.mxu0
    %v1159 = vadd.f32 0.0, %v1158
    %v1160 = vpop.f32.mrf.mxu0
    %1161 = vmatprep.mubr.f32.mxu0 0.0
    %1162 = vmatmul.mubr.f32.gmra.mxu0 %v562
    %v1163 = vpop.f32.mrf.mxu0
    %v1164 = vadd.f32 0.0, %v1163
    %v1165 = vpop.f32.mrf.mxu0
    %1166 = vmatprep.mubr.f32.mxu0 0.0
    %1167 = vmatmul.mubr.f32.gmra.mxu0 %v565
    %v1168 = vpop.f32.mrf.mxu0
    %v1169 = vadd.f32 0.0, %v1168
    %v1170 = vpop.f32.mrf.mxu0
    %1171 = vmatprep.mubr.f32.mxu0 0.0
    %1172 = vmatmul.mubr.f32.gmra.mxu0 %v568
    %v1173 = vpop.f32.mrf.mxu0
    %v1174 = vadd.f32 0.0, %v1173
    %v1175 = vpop.f32.mrf.mxu0
    %1176 = vmatprep.mubr.f32.mxu0 0.0
    %1177 = vmatmul.mubr.f32.gmra.mxu0 %v571
    %v1178 = vpop.f32.mrf.mxu0
    %v1179 = vadd.f32 0.0, %v1178
    %v1180 = vpop.f32.mrf.mxu0
    %1181 = vmatprep.mubr.f32.mxu0 0.0
    %1182 = vmatmul.mubr.f32.gmra.mxu0 %v574
    %v1183 = vpop.f32.mrf.mxu0
    %v1184 = vadd.f32 0.0, %v1183
    %v1185 = vpop.f32.mrf.mxu0
    %1186 = vmatprep.mubr.f32.mxu0 0.0
    %1187 = vmatmul.mubr.f32.gmra.mxu0 %v577
    %v1188 = vpop.f32.mrf.mxu0
    %v1189 = vadd.f32 0.0, %v1188
    %v1190 = vpop.f32.mrf.mxu0
    %1191 = vmatprep.mubr.f32.mxu0 0.0
    %1192 = vmatmul.mubr.f32.gmra.mxu0 %v580
    %v1193 = vpop.f32.mrf.mxu0
    %v1194 = vadd.f32 0.0, %v1193
    %v1195 = vpop.f32.mrf.mxu0
    %1196 = vmatprep.mubr.f32.mxu0 0.0
    %1197 = vmatmul.mubr.f32.gmra.mxu0 %v583
    %v1198 = vpop.f32.mrf.mxu0
    %v1199 = vadd.f32 0.0, %v1198
    %v1200 = vpop.f32.mrf.mxu0
    %1201 = vmatprep.mubr.f32.mxu0 0.0
    %1202 = vmatmul.mubr.f32.gmra.mxu0 %v586
    %v1203 = vpop.f32.mrf.mxu0
    %v1204 = vadd.f32 0.0, %v1203
    %v1205 = vpop.f32.mrf.mxu0
    %1206 = vmatprep.mubr.f32.mxu0 0.0
    %1207 = vmatmul.mubr.f32.gmra.mxu0 %v589
    %v1208 = vpop.f32.mrf.mxu0
    %v1209 = vadd.f32 0.0, %v1208
    %v1210 = vpop.f32.mrf.mxu0
    %1211 = vmatprep.mubr.f32.mxu0 0.0
    %1212 = vmatmul.mubr.f32.gmra.mxu0 %v592
    %v1213 = vpop.f32.mrf.mxu0
    %v1214 = vadd.f32 0.0, %v1213
    %v1215 = vpop.f32.mrf.mxu0
    %1216 = vmatprep.mubr.f32.mxu0 0.0
    %1217 = vmatmul.mubr.f32.gmra.mxu0 %v595
    %v1218 = vpop.f32.mrf.mxu0
    %v1219 = vadd.f32 0.0, %v1218
    %v1220 = vpop.f32.mrf.mxu0
    %1221 = vmatprep.mubr.f32.mxu0 0.0
    %1222 = vmatmul.mubr.f32.gmra.mxu0 %v598
    %v1223 = vpop.f32.mrf.mxu0
    %v1224 = vadd.f32 0.0, %v1223
    %v1225 = vpop.f32.mrf.mxu0
    %1226 = vmatprep.mubr.f32.mxu0 0.0
    %1227 = vmatmul.mubr.f32.gmra.mxu0 %v601
    %v1228 = vpop.f32.mrf.mxu0
    %v1229 = vadd.f32 0.0, %v1228
    %v1230 = vpop.f32.mrf.mxu0
    %1231 = vmatprep.mubr.f32.mxu0 0.0
    %1232 = vmatmul.mubr.f32.gmra.mxu0 %v604
    %v1233 = vpop.f32.mrf.mxu0
    %v1234 = vadd.f32 0.0, %v1233
    %v1235 = vpop.f32.mrf.mxu0
    %1236 = vmatprep.mubr.f32.mxu0 0.0
    %1237 = vmatmul.mubr.f32.gmra.mxu0 %v607
    %v1238 = vpop.f32.mrf.mxu0
    %v1239 = vadd.f32 0.0, %v1238
    %v1240 = vpop.f32.mrf.mxu0
    %1241 = vmatprep.mubr.f32.mxu0 0.0
    %1242 = vmatmul.mubr.f32.gmra.mxu0 %v610
    %v1243 = vpop.f32.mrf.mxu0
    %v1244 = vadd.f32 0.0, %v1243
    %v1245 = vpop.f32.mrf.mxu0
    %1246 = vmatprep.mubr.f32.mxu0 0.0
    %1247 = vmatmul.mubr.f32.gmra.mxu0 %v613
    %v1248 = vpop.f32.mrf.mxu0
    %v1249 = vadd.f32 0.0, %v1248
    %v1250 = vpop.f32.mrf.mxu0
    %1251 = vmatprep.mubr.f32.mxu0 0.0
    %1252 = vmatmul.mubr.f32.gmra.mxu0 %v616
    %v1253 = vpop.f32.mrf.mxu0
    %v1254 = vadd.f32 0.0, %v1253
    %v1255 = vpop.f32.mrf.mxu0
    %1256 = vmatprep.mubr.f32.mxu0 0.0
    %1257 = vmatmul.mubr.f32.gmra.mxu0 %v619
    %v1258 = vpop.f32.mrf.mxu0
    %v1259 = vadd.f32 0.0, %v1258
    %v1260 = vpop.f32.mrf.mxu0
    %1261 = vmatprep.mubr.f32.mxu0 0.0
    %1262 = vmatmul.mubr.f32.gmra.mxu0 %v622
    %v1263 = vpop.f32.mrf.mxu0
    %v1264 = vadd.f32 0.0, %v1263
    %v1265 = vpop.f32.mrf.mxu0
    %1266 = vmatprep.mubr.f32.mxu0 0.0
    %1267 = vmatmul.mubr.f32.gmra.mxu0 %v625
    %v1268 = vpop.f32.mrf.mxu0
    %v1269 = vadd.f32 0.0, %v1268
    %v1270 = vpop.f32.mrf.mxu0
    %1271 = vmatprep.mubr.f32.mxu0 0.0
    %1272 = vmatmul.mubr.f32.gmra.mxu0 %v628
    %v1273 = vpop.f32.mrf.mxu0
    %v1274 = vadd.f32 0.0, %v1273
    %v1275 = vpop.f32.mrf.mxu0
    %1276 = vmatprep.mubr.f32.mxu0 0.0
    %1277 = vmatmul.mubr.f32.gmra.mxu0 %v631
    %v1278 = vpop.f32.mrf.mxu0
    %v1279 = vadd.f32 0.0, %v1278
    %v1280 = vpop.f32.mrf.mxu0
    %1281 = vmatprep.mubr.f32.mxu0 0.0
    %1282 = vmatmul.mubr.f32.gmra.mxu0 %v634
    %v1283 = vpop.f32.mrf.mxu0
    %v1284 = vadd.f32 0.0, %v1283
    %v1285 = vpop.f32.mrf.mxu0
    %1286 = vmatprep.mubr.f32.mxu0 0.0
    %1287 = vmatmul.mubr.f32.gmra.mxu0 %v637
    %v1288 = vpop.f32.mrf.mxu0
    %v1289 = vadd.f32 0.0, %v1288
    %v1290 = vpop.f32.mrf.mxu0
    %1291 = vmatprep.mubr.f32.mxu0 0.0
    %1292 = vmatmul.mubr.f32.gmra.mxu0 %v640
    %v1293 = vpop.f32.mrf.mxu0
    %v1294 = vadd.f32 0.0, %v1293
    %v1295 = vpop.f32.mrf.mxu0
    %1296 = vmatprep.mubr.f32.mxu0 0.0
    %1297 = vmatmul.mubr.f32.gmra.mxu0 %v643
    %v1298 = vpop.f32.mrf.mxu0
    %v1299 = vadd.f32 0.0, %v1298
    %v1300 = vpop.f32.mrf.mxu0
    %1301 = vmatprep.mubr.f32.mxu0 0.0
    %1302 = vmatmul.mubr.f32.gmra.mxu0 %v646
    %v1303 = vpop.f32.mrf.mxu0
    %v1304 = vadd.f32 0.0, %v1303
    %v1305 = vpop.f32.mrf.mxu0
    %1306 = vmatprep.mubr.f32.mxu0 0.0
    %1307 = vmatmul.mubr.f32.gmra.mxu0 %v649
    %v1308 = vpop.f32.mrf.mxu0
    %v1309 = vadd.f32 0.0, %v1308
    %v1310 = vpop.f32.mrf.mxu0
    %1311 = vmatprep.mubr.f32.mxu0 0.0
    %1312 = vmatmul.mubr.f32.gmra.mxu0 %v652
    %v1313 = vpop.f32.mrf.mxu0
    %v1314 = vadd.f32 0.0, %v1313
    %v1315 = vpop.f32.mrf.mxu0
    %1316 = vmatprep.mubr.f32.mxu0 0.0
    %1317 = vmatmul.mubr.f32.gmra.mxu0 %v655
    %v1318 = vpop.f32.mrf.mxu0
    %v1319 = vadd.f32 0.0, %v1318
    %v1320 = vpop.f32.mrf.mxu0
    %1321 = vmatprep.mubr.f32.mxu0 0.0
    %1322 = vmatmul.mubr.f32.gmra.mxu0 %v658
    %v1323 = vpop.f32.mrf.mxu0
    %v1324 = vadd.f32 0.0, %v1323
    %v1325 = vpop.f32.mrf.mxu0
    %1326 = vmatprep.mubr.f32.mxu0 0.0
    %1327 = vmatmul.mubr.f32.gmra.mxu0 %v661
    %v1328 = vpop.f32.mrf.mxu0
    %v1329 = vadd.f32 0.0, %v1328
    %v1330 = vpop.f32.mrf.mxu0
    %1331 = vmatprep.mubr.f32.mxu0 0.0
    %1332 = vmatmul.mubr.f32.gmra.mxu0 %v664
    %v1333 = vpop.f32.mrf.mxu0
    %v1334 = vadd.f32 0.0, %v1333
    %v1335 = vpop.f32.mrf.mxu0
    %1336 = vmatprep.mubr.f32.mxu0 0.0
    %1337 = vmatmul.mubr.f32.gmra.mxu0 %v667
    %v1338 = vpop.f32.mrf.mxu0
    %v1339 = vadd.f32 0.0, %v1338
    %v1340 = vpop.f32.mrf.mxu0
    %1341 = vmatprep.mubr.f32.mxu0 0.0
    %1342 = vmatmul.mubr.f32.gmra.mxu0 %v670
    %v1343 = vpop.f32.mrf.mxu0
    %v1344 = vadd.f32 0.0, %v1343
    %v1345 = vpop.f32.mrf.mxu0
    %1346 = vmatprep.mubr.f32.mxu0 0.0
    %1347 = vmatmul.mubr.f32.gmra.mxu0 %v673
    %v1348 = vpop.f32.mrf.mxu0
    %v1349 = vadd.f32 0.0, %v1348
    %v1350 = vpop.f32.mrf.mxu0
    %1351 = vmatprep.mubr.f32.mxu0 0.0
    %1352 = vmatmul.mubr.f32.gmra.mxu0 %v676
    %v1353 = vpop.f32.mrf.mxu0
    %v1354 = vadd.f32 0.0, %v1353
    %v1355 = vpop.f32.mrf.mxu0
    %1356 = vmatprep.mubr.f32.mxu0 0.0
    %1357 = vmatmul.mubr.f32.gmra.mxu0 %v679
    %v1358 = vpop.f32.mrf.mxu0
    %v1359 = vadd.f32 0.0, %v1358
    %v1360 = vpop.f32.mrf.mxu0
    %1361 = vmatprep.mubr.f32.mxu0 0.0
    %1362 = vmatmul.mubr.f32.gmra.mxu0 %v682
    %v1363 = vpop.f32.mrf.mxu0
    %v1364 = vadd.f32 0.0, %v1363
    %v1365 = vpop.f32.mrf.mxu0
    %1366 = vmatprep.mubr.f32.mxu0 0.0
    %1367 = vmatmul.mubr.f32.gmra.mxu0 %v685
    %v1368 = vpop.f32.mrf.mxu0
    %v1369 = vadd.f32 0.0, %v1368
    %v1370 = vpop.f32.mrf.mxu0
    %1371 = vmatprep.mubr.f32.mxu0 0.0
    %1372 = vmatmul.mubr.f32.gmra.mxu0 %v688
    %v1373 = vpop.f32.mrf.mxu0
    %v1374 = vadd.f32 0.0, %v1373
    %v1375 = vpop.f32.mrf.mxu0
    %1376 = vmatprep.mubr.f32.mxu0 0.0
    %1377 = vmatmul.mubr.f32.gmra.mxu0 %v691
    %v1378 = vpop.f32.mrf.mxu0
    %v1379 = vadd.f32 0.0, %v1378
    %v1380 = vpop.f32.mrf.mxu0
    %1381 = vmatprep.mubr.f32.mxu0 0.0
    %1382 = vmatmul.mubr.f32.gmra.mxu0 %v694
    %v1383 = vpop.f32.mrf.mxu0
    %v1384 = vadd.f32 0.0, %v1383
    %v1385 = vpop.f32.mrf.mxu0
    %1386 = vmatprep.mubr.f32.mxu0 0.0
    %1387 = vmatmul.mubr.f32.gmra.mxu0 %v697
    %v1388 = vpop.f32.mrf.mxu0
    %v1389 = vadd.f32 0.0, %v1388
    %v1390 = vpop.f32.mrf.mxu0
    %1391 = vmatprep.mubr.f32.mxu0 0.0
    %1392 = vmatmul.mubr.f32.gmra.mxu0 %v700
    %v1393 = vpop.f32.mrf.mxu0
    %v1394 = vadd.f32 0.0, %v1393
    %v1395 = vpop.f32.mrf.mxu0
    %1396 = vmatprep.mubr.f32.mxu0 0.0
    %1397 = vmatmul.mubr.f32.gmra.mxu0 %v703
    %v1398 = vpop.f32.mrf.mxu0
    %v1399 = vadd.f32 0.0, %v1398
    %v1400 = vpop.f32.mrf.mxu0
    %1401 = vmatprep.mubr.f32.mxu0 0.0
    %1402 = vmatmul.mubr.f32.gmra.mxu0 %v706
    %v1403 = vpop.f32.mrf.mxu0
    %v1404 = vadd.f32 0.0, %v1403
    %v1405 = vpop.f32.mrf.mxu0
    %1406 = vmatprep.mubr.f32.mxu0 0.0
    %1407 = vmatmul.mubr.f32.gmra.mxu0 %v709
    %v1408 = vpop.f32.mrf.mxu0
    %v1409 = vadd.f32 0.0, %v1408
    %v1410 = vpop.f32.mrf.mxu0
    %1411 = vmatprep.mubr.f32.mxu0 0.0
    %1412 = vmatmul.mubr.f32.gmra.mxu0 %v712
    %v1413 = vpop.f32.mrf.mxu0
    %v1414 = vadd.f32 0.0, %v1413
    %v1415 = vpop.f32.mrf.mxu0
    %1416 = vmatprep.mubr.f32.mxu0 0.0
    %1417 = vmatmul.mubr.f32.gmra.mxu0 %v715
    %v1418 = vpop.f32.mrf.mxu0
    %v1419 = vadd.f32 0.0, %v1418
    %v1420 = vpop.f32.mrf.mxu0
    %1421 = vmatprep.mubr.f32.mxu0 0.0
    %1422 = vmatmul.mubr.f32.gmra.mxu0 %v718
    %v1423 = vpop.f32.mrf.mxu0
    %v1424 = vadd.f32 0.0, %v1423
    %v1425 = vpop.f32.mrf.mxu0
    %1426 = vmatprep.mubr.f32.mxu0 0.0
    %1427 = vmatmul.mubr.f32.gmra.mxu0 %v721
    %v1428 = vpop.f32.mrf.mxu0
    %v1429 = vadd.f32 0.0, %v1428
    %v1430 = vpop.f32.mrf.mxu0
    %1431 = vdwg.mxu0
    %vm1432 = vcmp.ge.f32.partialorder %v794, 0.0
    %vm1433 = vcmp.ge.f32.partialorder %v799, 0.0
    %vm1434 = vcmp.ge.f32.partialorder %v804, 0.0
    %vm1435 = vcmp.ge.f32.partialorder %v809, 0.0
    %vm1436 = vcmp.ge.f32.partialorder %v814, 0.0
    %vm1437 = vcmp.ge.f32.partialorder %v819, 0.0
    %vm1438 = vcmp.ge.f32.partialorder %v824, 0.0
    %vm1439 = vcmp.ge.f32.partialorder %v829, 0.0
    %vm1440 = vcmp.ge.f32.partialorder %v834, 0.0
    %vm1441 = vcmp.ge.f32.partialorder %v839, 0.0
    %vm1442 = vcmp.ge.f32.partialorder %v844, 0.0
    %vm1443 = vcmp.ge.f32.partialorder %v849, 0.0
    %vm1444 = vcmp.ge.f32.partialorder %v854, 0.0
    %vm1445 = vcmp.ge.f32.partialorder %v859, 0.0
    %vm1446 = vcmp.ge.f32.partialorder %v864, 0.0
    %vm1447 = vcmp.ge.f32.partialorder %v869, 0.0
    %vm1448 = vcmp.ge.f32.partialorder %v874, 0.0
    %vm1449 = vcmp.ge.f32.partialorder %v879, 0.0
    %vm1450 = vcmp.ge.f32.partialorder %v884, 0.0
    %vm1451 = vcmp.ge.f32.partialorder %v889, 0.0
    %vm1452 = vcmp.ge.f32.partialorder %v894, 0.0
    %vm1453 = vcmp.ge.f32.partialorder %v899, 0.0
    %vm1454 = vcmp.ge.f32.partialorder %v904, 0.0
    %vm1455 = vcmp.ge.f32.partialorder %v909, 0.0
    %vm1456 = vcmp.ge.f32.partialorder %v914, 0.0
    %vm1457 = vcmp.ge.f32.partialorder %v919, 0.0
    %vm1458 = vcmp.ge.f32.partialorder %v924, 0.0
    %vm1459 = vcmp.ge.f32.partialorder %v929, 0.0
    %vm1460 = vcmp.ge.f32.partialorder %v934, 0.0
    %vm1461 = vcmp.ge.f32.partialorder %v939, 0.0
    %vm1462 = vcmp.ge.f32.partialorder %v944, 0.0
    %vm1463 = vcmp.ge.f32.partialorder %v949, 0.0
    %vm1464 = vcmp.ge.f32.partialorder %v954, 0.0
    %vm1465 = vcmp.ge.f32.partialorder %v959, 0.0
    %vm1466 = vcmp.ge.f32.partialorder %v964, 0.0
    %vm1467 = vcmp.ge.f32.partialorder %v969, 0.0
    %vm1468 = vcmp.ge.f32.partialorder %v974, 0.0
    %vm1469 = vcmp.ge.f32.partialorder %v979, 0.0
    %vm1470 = vcmp.ge.f32.partialorder %v984, 0.0
    %vm1471 = vcmp.ge.f32.partialorder %v989, 0.0
    %vm1472 = vcmp.ge.f32.partialorder %v994, 0.0
    %vm1473 = vcmp.ge.f32.partialorder %v999, 0.0
    %vm1474 = vcmp.ge.f32.partialorder %v1004, 0.0
    %vm1475 = vcmp.ge.f32.partialorder %v1009, 0.0
    %vm1476 = vcmp.ge.f32.partialorder %v1014, 0.0
    %vm1477 = vcmp.ge.f32.partialorder %v1019, 0.0
    %vm1478 = vcmp.ge.f32.partialorder %v1024, 0.0
    %vm1479 = vcmp.ge.f32.partialorder %v1029, 0.0
    %vm1480 = vcmp.ge.f32.partialorder %v1034, 0.0
    %vm1481 = vcmp.ge.f32.partialorder %v1039, 0.0
    %vm1482 = vcmp.ge.f32.partialorder %v1044, 0.0
    %vm1483 = vcmp.ge.f32.partialorder %v1049, 0.0
    %vm1484 = vcmp.ge.f32.partialorder %v1054, 0.0
    %vm1485 = vcmp.ge.f32.partialorder %v1059, 0.0
    %vm1486 = vcmp.ge.f32.partialorder %v1064, 0.0
    %vm1487 = vcmp.ge.f32.partialorder %v1069, 0.0
    %vm1488 = vcmp.ge.f32.partialorder %v1074, 0.0
    %vm1489 = vcmp.ge.f32.partialorder %v1079, 0.0
    %vm1490 = vcmp.ge.f32.partialorder %v1084, 0.0
    %vm1491 = vcmp.ge.f32.partialorder %v1089, 0.0
    %vm1492 = vcmp.ge.f32.partialorder %v1094, 0.0
    %vm1493 = vcmp.ge.f32.partialorder %v1099, 0.0
    %vm1494 = vcmp.ge.f32.partialorder %v1104, 0.0
    %vm1495 = vcmp.ge.f32.partialorder %v1109, 0.0
    %vm1496 = vcmp.ge.f32.partialorder %v1114, 0.0
    %vm1497 = vcmp.ge.f32.partialorder %v1119, 0.0
    %vm1498 = vcmp.ge.f32.partialorder %v1124, 0.0
    %vm1499 = vcmp.ge.f32.partialorder %v1129, 0.0
    %vm1500 = vcmp.ge.f32.partialorder %v1134, 0.0
    %vm1501 = vcmp.ge.f32.partialorder %v1139, 0.0
    %vm1502 = vcmp.ge.f32.partialorder %v1144, 0.0
    %vm1503 = vcmp.ge.f32.partialorder %v1149, 0.0
    %vm1504 = vcmp.ge.f32.partialorder %v1154, 0.0
    %vm1505 = vcmp.ge.f32.partialorder %v1159, 0.0
    %vm1506 = vcmp.ge.f32.partialorder %v1164, 0.0
    %vm1507 = vcmp.ge.f32.partialorder %v1169, 0.0
    %vm1508 = vcmp.ge.f32.partialorder %v1174, 0.0
    %vm1509 = vcmp.ge.f32.partialorder %v1179, 0.0
    %vm1510 = vcmp.ge.f32.partialorder %v1184, 0.0
    %vm1511 = vcmp.ge.f32.partialorder %v1189, 0.0
    %vm1512 = vcmp.ge.f32.partialorder %v1194, 0.0
    %vm1513 = vcmp.ge.f32.partialorder %v1199, 0.0
    %vm1514 = vcmp.ge.f32.partialorder %v1204, 0.0
    %vm1515 = vcmp.ge.f32.partialorder %v1209, 0.0
    %vm1516 = vcmp.ge.f32.partialorder %v1214, 0.0
    %vm1517 = vcmp.ge.f32.partialorder %v1219, 0.0
    %vm1518 = vcmp.ge.f32.partialorder %v1224, 0.0
    %vm1519 = vcmp.ge.f32.partialorder %v1229, 0.0
    %vm1520 = vcmp.ge.f32.partialorder %v1234, 0.0
    %vm1521 = vcmp.ge.f32.partialorder %v1239, 0.0
    %vm1522 = vcmp.ge.f32.partialorder %v1244, 0.0
    %vm1523 = vcmp.ge.f32.partialorder %v1249, 0.0
    %vm1524 = vcmp.ge.f32.partialorder %v1254, 0.0
    %vm1525 = vcmp.ge.f32.partialorder %v1259, 0.0
    %vm1526 = vcmp.ge.f32.partialorder %v1264, 0.0
    %vm1527 = vcmp.ge.f32.partialorder %v1269, 0.0
    %vm1528 = vcmp.ge.f32.partialorder %v1274, 0.0
    %vm1529 = vcmp.ge.f32.partialorder %v1279, 0.0
    %vm1530 = vcmp.ge.f32.partialorder %v1284, 0.0
    %vm1531 = vcmp.ge.f32.partialorder %v1289, 0.0
    %vm1532 = vcmp.ge.f32.partialorder %v1294, 0.0
    %vm1533 = vcmp.ge.f32.partialorder %v1299, 0.0
    %vm1534 = vcmp.ge.f32.partialorder %v1304, 0.0
    %vm1535 = vcmp.ge.f32.partialorder %v1309, 0.0
    %vm1536 = vcmp.ge.f32.partialorder %v1314, 0.0
    %vm1537 = vcmp.ge.f32.partialorder %v1319, 0.0
    %vm1538 = vcmp.ge.f32.partialorder %v1324, 0.0
    %vm1539 = vcmp.ge.f32.partialorder %v1329, 0.0
    %vm1540 = vcmp.ge.f32.partialorder %v1334, 0.0
    %vm1541 = vcmp.ge.f32.partialorder %v1339, 0.0
    %vm1542 = vcmp.ge.f32.partialorder %v1344, 0.0
    %vm1543 = vcmp.ge.f32.partialorder %v1349, 0.0
    %vm1544 = vcmp.ge.f32.partialorder %v1354, 0.0
    %vm1545 = vcmp.ge.f32.partialorder %v1359, 0.0
    %vm1546 = vcmp.ge.f32.partialorder %v1364, 0.0
    %vm1547 = vcmp.ge.f32.partialorder %v1369, 0.0
    %vm1548 = vcmp.ge.f32.partialorder %v1374, 0.0
    %vm1549 = vcmp.ge.f32.partialorder %v1379, 0.0
    %vm1550 = vcmp.ge.f32.partialorder %v1384, 0.0
    %vm1551 = vcmp.ge.f32.partialorder %v1389, 0.0
    %vm1552 = vcmp.ge.f32.partialorder %v1394, 0.0
    %vm1553 = vcmp.ge.f32.partialorder %v1399, 0.0
    %vm1554 = vcmp.ge.f32.partialorder %v1404, 0.0
    %vm1555 = vcmp.ge.f32.partialorder %v1409, 0.0
    %vm1556 = vcmp.ge.f32.partialorder %v1414, 0.0
    %vm1557 = vcmp.ge.f32.partialorder %v1419, 0.0
    %vm1558 = vcmp.ge.f32.partialorder %v1424, 0.0
    %vm1559 = vcmp.ge.f32.partialorder %v1429, 0.0
    %v1560 = vmul.f32 %v794, 0.01
    %v1561 = vmul.f32 %v799, 0.01
    %v1562 = vmul.f32 %v804, 0.01
    %v1563 = vmul.f32 %v809, 0.01
    %v1564 = vmul.f32 %v814, 0.01
    %v1565 = vmul.f32 %v819, 0.01
    %v1566 = vmul.f32 %v824, 0.01
    %v1567 = vmul.f32 %v829, 0.01
    %v1568 = vmul.f32 %v834, 0.01
    %v1569 = vmul.f32 %v839, 0.01
    %v1570 = vmul.f32 %v844, 0.01
    %v1571 = vmul.f32 %v849, 0.01
    %v1572 = vmul.f32 %v854, 0.01
    %v1573 = vmul.f32 %v859, 0.01
    %v1574 = vmul.f32 %v864, 0.01
    %v1575 = vmul.f32 %v869, 0.01
    %v1576 = vmul.f32 %v874, 0.01
    %v1577 = vmul.f32 %v879, 0.01
    %v1578 = vmul.f32 %v884, 0.01
    %v1579 = vmul.f32 %v889, 0.01
    %v1580 = vmul.f32 %v894, 0.01
    %v1581 = vmul.f32 %v899, 0.01
    %v1582 = vmul.f32 %v904, 0.01
    %v1583 = vmul.f32 %v909, 0.01
    %v1584 = vmul.f32 %v914, 0.01
    %v1585 = vmul.f32 %v919, 0.01
    %v1586 = vmul.f32 %v924, 0.01
    %v1587 = vmul.f32 %v929, 0.01
    %v1588 = vmul.f32 %v934, 0.01
    %v1589 = vmul.f32 %v939, 0.01
    %v1590 = vmul.f32 %v944, 0.01
    %v1591 = vmul.f32 %v949, 0.01
    %v1592 = vmul.f32 %v954, 0.01
    %v1593 = vmul.f32 %v959, 0.01
    %v1594 = vmul.f32 %v964, 0.01
    %v1595 = vmul.f32 %v969, 0.01
    %v1596 = vmul.f32 %v974, 0.01
    %v1597 = vmul.f32 %v979, 0.01
    %v1598 = vmul.f32 %v984, 0.01
    %v1599 = vmul.f32 %v989, 0.01
    %v1600 = vmul.f32 %v994, 0.01
    %v1601 = vmul.f32 %v999, 0.01
    %v1602 = vmul.f32 %v1004, 0.01
    %v1603 = vmul.f32 %v1009, 0.01
    %v1604 = vmul.f32 %v1014, 0.01
    %v1605 = vmul.f32 %v1019, 0.01
    %v1606 = vmul.f32 %v1024, 0.01
    %v1607 = vmul.f32 %v1029, 0.01
    %v1608 = vmul.f32 %v1034, 0.01
    %v1609 = vmul.f32 %v1039, 0.01
    %v1610 = vmul.f32 %v1044, 0.01
    %v1611 = vmul.f32 %v1049, 0.01
    %v1612 = vmul.f32 %v1054, 0.01
    %v1613 = vmul.f32 %v1059, 0.01
    %v1614 = vmul.f32 %v1064, 0.01
    %v1615 = vmul.f32 %v1069, 0.01
    %v1616 = vmul.f32 %v1074, 0.01
    %v1617 = vmul.f32 %v1079, 0.01
    %v1618 = vmul.f32 %v1084, 0.01
    %v1619 = vmul.f32 %v1089, 0.01
    %v1620 = vmul.f32 %v1094, 0.01
    %v1621 = vmul.f32 %v1099, 0.01
    %v1622 = vmul.f32 %v1104, 0.01
    %v1623 = vmul.f32 %v1109, 0.01
    %v1624 = vmul.f32 %v1114, 0.01
    %v1625 = vmul.f32 %v1119, 0.01
    %v1626 = vmul.f32 %v1124, 0.01
    %v1627 = vmul.f32 %v1129, 0.01
    %v1628 = vmul.f32 %v1134, 0.01
    %v1629 = vmul.f32 %v1139, 0.01
    %v1630 = vmul.f32 %v1144, 0.01
    %v1631 = vmul.f32 %v1149, 0.01
    %v1632 = vmul.f32 %v1154, 0.01
    %v1633 = vmul.f32 %v1159, 0.01
    %v1634 = vmul.f32 %v1164, 0.01
    %v1635 = vmul.f32 %v1169, 0.01
    %v1636 = vmul.f32 %v1174, 0.01
    %v1637 = vmul.f32 %v1179, 0.01
    %v1638 = vmul.f32 %v1184, 0.01
    %v1639 = vmul.f32 %v1189, 0.01
    %v1640 = vmul.f32 %v1194, 0.01
    %v1641 = vmul.f32 %v1199, 0.01
    %v1642 = vmul.f32 %v1204, 0.01
    %v1643 = vmul.f32 %v1209, 0.01
    %v1644 = vmul.f32 %v1214, 0.01
    %v1645 = vmul.f32 %v1219, 0.01
    %v1646 = vmul.f32 %v1224, 0.01
    %v1647 = vmul.f32 %v1229, 0.01
    %v1648 = vmul.f32 %v1234, 0.01
    %v1649 = vmul.f32 %v1239, 0.01
    %v1650 = vmul.f32 %v1244, 0.01
    %v1651 = vmul.f32 %v1249, 0.01
    %v1652 = vmul.f32 %v1254, 0.01
    %v1653 = vmul.f32 %v1259, 0.01
    %v1654 = vmul.f32 %v1264, 0.01
    %v1655 = vmul.f32 %v1269, 0.01
    %v1656 = vmul.f32 %v1274, 0.01
    %v1657 = vmul.f32 %v1279, 0.01
    %v1658 = vmul.f32 %v1284, 0.01
    %v1659 = vmul.f32 %v1289, 0.01
    %v1660 = vmul.f32 %v1294, 0.01
    %v1661 = vmul.f32 %v1299, 0.01
    %v1662 = vmul.f32 %v1304, 0.01
    %v1663 = vmul.f32 %v1309, 0.01
    %v1664 = vmul.f32 %v1314, 0.01
    %v1665 = vmul.f32 %v1319, 0.01
    %v1666 = vmul.f32 %v1324, 0.01
    %v1667 = vmul.f32 %v1329, 0.01
    %v1668 = vmul.f32 %v1334, 0.01
    %v1669 = vmul.f32 %v1339, 0.01
    %v1670 = vmul.f32 %v1344, 0.01
    %v1671 = vmul.f32 %v1349, 0.01
    %v1672 = vmul.f32 %v1354, 0.01
    %v1673 = vmul.f32 %v1359, 0.01
    %v1674 = vmul.f32 %v1364, 0.01
    %v1675 = vmul.f32 %v1369, 0.01
    %v1676 = vmul.f32 %v1374, 0.01
    %v1677 = vmul.f32 %v1379, 0.01
    %v1678 = vmul.f32 %v1384, 0.01
    %v1679 = vmul.f32 %v1389, 0.01
    %v1680 = vmul.f32 %v1394, 0.01
    %v1681 = vmul.f32 %v1399, 0.01
    %v1682 = vmul.f32 %v1404, 0.01
    %v1683 = vmul.f32 %v1409, 0.01
    %v1684 = vmul.f32 %v1414, 0.01
    %v1685 = vmul.f32 %v1419, 0.01
    %v1686 = vmul.f32 %v1424, 0.01
    %v1687 = vmul.f32 %v1429, 0.01
    %v1688 = vsel %vm1432, %v794, %v1560
    %v1689 = vsel %vm1433, %v799, %v1561
    %v1690 = vsel %vm1434, %v804, %v1562
    %v1691 = vsel %vm1435, %v809, %v1563
    %v1692 = vsel %vm1436, %v814, %v1564
    %v1693 = vsel %vm1437, %v819, %v1565
    %v1694 = vsel %vm1438, %v824, %v1566
    %v1695 = vsel %vm1439, %v829, %v1567
    %v1696 = vsel %vm1440, %v834, %v1568
    %v1697 = vsel %vm1441, %v839, %v1569
    %v1698 = vsel %vm1442, %v844, %v1570
    %v1699 = vsel %vm1443, %v849, %v1571
    %v1700 = vsel %vm1444, %v854, %v1572
    %v1701 = vsel %vm1445, %v859, %v1573
    %v1702 = vsel %vm1446, %v864, %v1574
    %v1703 = vsel %vm1447, %v869, %v1575
    %v1704 = vsel %vm1448, %v874, %v1576
    %v1705 = vsel %vm1449, %v879, %v1577
    %v1706 = vsel %vm1450, %v884, %v1578
    %v1707 = vsel %vm1451, %v889, %v1579
    %v1708 = vsel %vm1452, %v894, %v1580
    %v1709 = vsel %vm1453, %v899, %v1581
    %v1710 = vsel %vm1454, %v904, %v1582
    %v1711 = vsel %vm1455, %v909, %v1583
    %v1712 = vsel %vm1456, %v914, %v1584
    %v1713 = vsel %vm1457, %v919, %v1585
    %v1714 = vsel %vm1458, %v924, %v1586
    %v1715 = vsel %vm1459, %v929, %v1587
    %v1716 = vsel %vm1460, %v934, %v1588
    %v1717 = vsel %vm1461, %v939, %v1589
    %v1718 = vsel %vm1462, %v944, %v1590
    %v1719 = vsel %vm1463, %v949, %v1591
    %v1720 = vsel %vm1464, %v954, %v1592
    %v1721 = vsel %vm1465, %v959, %v1593
    %v1722 = vsel %vm1466, %v964, %v1594
    %v1723 = vsel %vm1467, %v969, %v1595
    %v1724 = vsel %vm1468, %v974, %v1596
    %v1725 = vsel %vm1469, %v979, %v1597
    %v1726 = vsel %vm1470, %v984, %v1598
    %v1727 = vsel %vm1471, %v989, %v1599
    %v1728 = vsel %vm1472, %v994, %v1600
    %v1729 = vsel %vm1473, %v999, %v1601
    %v1730 = vsel %vm1474, %v1004, %v1602
    %v1731 = vsel %vm1475, %v1009, %v1603
    %v1732 = vsel %vm1476, %v1014, %v1604
    %v1733 = vsel %vm1477, %v1019, %v1605
    %v1734 = vsel %vm1478, %v1024, %v1606
    %v1735 = vsel %vm1479, %v1029, %v1607
    %v1736 = vsel %vm1480, %v1034, %v1608
    %v1737 = vsel %vm1481, %v1039, %v1609
    %v1738 = vsel %vm1482, %v1044, %v1610
    %v1739 = vsel %vm1483, %v1049, %v1611
    %v1740 = vsel %vm1484, %v1054, %v1612
    %v1741 = vsel %vm1485, %v1059, %v1613
    %v1742 = vsel %vm1486, %v1064, %v1614
    %v1743 = vsel %vm1487, %v1069, %v1615
    %v1744 = vsel %vm1488, %v1074, %v1616
    %v1745 = vsel %vm1489, %v1079, %v1617
    %v1746 = vsel %vm1490, %v1084, %v1618
    %v1747 = vsel %vm1491, %v1089, %v1619
    %v1748 = vsel %vm1492, %v1094, %v1620
    %v1749 = vsel %vm1493, %v1099, %v1621
    %v1750 = vsel %vm1494, %v1104, %v1622
    %v1751 = vsel %vm1495, %v1109, %v1623
    %v1752 = vsel %vm1496, %v1114, %v1624
    %v1753 = vsel %vm1497, %v1119, %v1625
    %v1754 = vsel %vm1498, %v1124, %v1626
    %v1755 = vsel %vm1499, %v1129, %v1627
    %v1756 = vsel %vm1500, %v1134, %v1628
    %v1757 = vsel %vm1501, %v1139, %v1629
    %v1758 = vsel %vm1502, %v1144, %v1630
    %v1759 = vsel %vm1503, %v1149, %v1631
    %v1760 = vsel %vm1504, %v1154, %v1632
    %v1761 = vsel %vm1505, %v1159, %v1633
    %v1762 = vsel %vm1506, %v1164, %v1634
    %v1763 = vsel %vm1507, %v1169, %v1635
    %v1764 = vsel %vm1508, %v1174, %v1636
    %v1765 = vsel %vm1509, %v1179, %v1637
    %v1766 = vsel %vm1510, %v1184, %v1638
    %v1767 = vsel %vm1511, %v1189, %v1639
    %v1768 = vsel %vm1512, %v1194, %v1640
    %v1769 = vsel %vm1513, %v1199, %v1641
    %v1770 = vsel %vm1514, %v1204, %v1642
    %v1771 = vsel %vm1515, %v1209, %v1643
    %v1772 = vsel %vm1516, %v1214, %v1644
    %v1773 = vsel %vm1517, %v1219, %v1645
    %v1774 = vsel %vm1518, %v1224, %v1646
    %v1775 = vsel %vm1519, %v1229, %v1647
    %v1776 = vsel %vm1520, %v1234, %v1648
    %v1777 = vsel %vm1521, %v1239, %v1649
    %v1778 = vsel %vm1522, %v1244, %v1650
    %v1779 = vsel %vm1523, %v1249, %v1651
    %v1780 = vsel %vm1524, %v1254, %v1652
    %v1781 = vsel %vm1525, %v1259, %v1653
    %v1782 = vsel %vm1526, %v1264, %v1654
    %v1783 = vsel %vm1527, %v1269, %v1655
    %v1784 = vsel %vm1528, %v1274, %v1656
    %v1785 = vsel %vm1529, %v1279, %v1657
    %v1786 = vsel %vm1530, %v1284, %v1658
    %v1787 = vsel %vm1531, %v1289, %v1659
    %v1788 = vsel %vm1532, %v1294, %v1660
    %v1789 = vsel %vm1533, %v1299, %v1661
    %v1790 = vsel %vm1534, %v1304, %v1662
    %v1791 = vsel %vm1535, %v1309, %v1663
    %v1792 = vsel %vm1536, %v1314, %v1664
    %v1793 = vsel %vm1537, %v1319, %v1665
    %v1794 = vsel %vm1538, %v1324, %v1666
    %v1795 = vsel %vm1539, %v1329, %v1667
    %v1796 = vsel %vm1540, %v1334, %v1668
    %v1797 = vsel %vm1541, %v1339, %v1669
    %v1798 = vsel %vm1542, %v1344, %v1670
    %v1799 = vsel %vm1543, %v1349, %v1671
    %v1800 = vsel %vm1544, %v1354, %v1672
    %v1801 = vsel %vm1545, %v1359, %v1673
    %v1802 = vsel %vm1546, %v1364, %v1674
    %v1803 = vsel %vm1547, %v1369, %v1675
    %v1804 = vsel %vm1548, %v1374, %v1676
    %v1805 = vsel %vm1549, %v1379, %v1677
    %v1806 = vsel %vm1550, %v1384, %v1678
    %v1807 = vsel %vm1551, %v1389, %v1679
    %v1808 = vsel %vm1552, %v1394, %v1680
    %v1809 = vsel %vm1553, %v1399, %v1681
    %v1810 = vsel %vm1554, %v1404, %v1682
    %v1811 = vsel %vm1555, %v1409, %v1683
    %v1812 = vsel %vm1556, %v1414, %v1684
    %v1813 = vsel %vm1557, %v1419, %v1685
    %v1814 = vsel %vm1558, %v1424, %v1686
    %v1815 = vsel %vm1559, %v1429, %v1687
    %vm1816 = vcmask 31744
    %1817 = vst.msk [vmem:[%s2] sm:$0xff] %vm1816, %v1688
    %1818 = vst.msk [vmem:[%s2 + $0x8] sm:$0xff] %vm1816, %v1689
    %1819 = vst.msk [vmem:[%s2 + $0x10] sm:$0xff] %vm1816, %v1690
    %1820 = vst.msk [vmem:[%s2 + $0x18] sm:$0xff] %vm1816, %v1691
    %1821 = vst.msk [vmem:[%s2 + $0x20] sm:$0xff] %vm1816, %v1692
    %1822 = vst.msk [vmem:[%s2 + $0x28] sm:$0xff] %vm1816, %v1693
    %1823 = vst.msk [vmem:[%s2 + $0x30] sm:$0xff] %vm1816, %v1694
    %1824 = vst.msk [vmem:[%s2 + $0x38] sm:$0xff] %vm1816, %v1695
    %1825 = vst.msk [vmem:[%s2 + $0x40] sm:$0xff] %vm1816, %v1696
    %1826 = vst.msk [vmem:[%s2 + $0x48] sm:$0xff] %vm1816, %v1697
    %1827 = vst.msk [vmem:[%s2 + $0x50] sm:$0xff] %vm1816, %v1698
    %1828 = vst.msk [vmem:[%s2 + $0x58] sm:$0xff] %vm1816, %v1699
    %1829 = vst.msk [vmem:[%s2 + $0x60] sm:$0xff] %vm1816, %v1700
    %1830 = vst.msk [vmem:[%s2 + $0x68] sm:$0xff] %vm1816, %v1701
    %1831 = vst.msk [vmem:[%s2 + $0x70] sm:$0xff] %vm1816, %v1702
    %1832 = vst.msk [vmem:[%s2 + $0x78] sm:$0xff] %vm1816, %v1703
    %1833 = vst.msk [vmem:[%s2 + $0x80] sm:$0xff] %vm1816, %v1704
    %1834 = vst.msk [vmem:[%s2 + $0x88] sm:$0xff] %vm1816, %v1705
    %1835 = vst.msk [vmem:[%s2 + $0x90] sm:$0xff] %vm1816, %v1706
    %1836 = vst.msk [vmem:[%s2 + $0x98] sm:$0xff] %vm1816, %v1707
    %1837 = vst.msk [vmem:[%s2 + $0xa0] sm:$0xff] %vm1816, %v1708
    %1838 = vst.msk [vmem:[%s2 + $0xa8] sm:$0xff] %vm1816, %v1709
    %1839 = vst.msk [vmem:[%s2 + $0xb0] sm:$0xff] %vm1816, %v1710
    %1840 = vst.msk [vmem:[%s2 + $0xb8] sm:$0xff] %vm1816, %v1711
    %1841 = vst.msk [vmem:[%s2 + $0xc0] sm:$0xff] %vm1816, %v1712
    %1842 = vst.msk [vmem:[%s2 + $0xc8] sm:$0xff] %vm1816, %v1713
    %1843 = vst.msk [vmem:[%s2 + $0xd0] sm:$0xff] %vm1816, %v1714
    %1844 = vst.msk [vmem:[%s2 + $0xd8] sm:$0xff] %vm1816, %v1715
    %1845 = vst.msk [vmem:[%s2 + $0xe0] sm:$0xff] %vm1816, %v1716
    %1846 = vst.msk [vmem:[%s2 + $0xe8] sm:$0xff] %vm1816, %v1717
    %1847 = vst.msk [vmem:[%s2 + $0xf0] sm:$0xff] %vm1816, %v1718
    %1848 = vst.msk [vmem:[%s2 + $0xf8] sm:$0xff] %vm1816, %v1719
    %1849 = vst.msk [vmem:[%s2 + $0x100] sm:$0xff] %vm1816, %v1720
    %1850 = vst.msk [vmem:[%s2 + $0x108] sm:$0xff] %vm1816, %v1721
    %1851 = vst.msk [vmem:[%s2 + $0x110] sm:$0xff] %vm1816, %v1722
    %1852 = vst.msk [vmem:[%s2 + $0x118] sm:$0xff] %vm1816, %v1723
    %1853 = vst.msk [vmem:[%s2 + $0x120] sm:$0xff] %vm1816, %v1724
    %1854 = vst.msk [vmem:[%s2 + $0x128] sm:$0xff] %vm1816, %v1725
    %1855 = vst.msk [vmem:[%s2 + $0x130] sm:$0xff] %vm1816, %v1726
    %1856 = vst.msk [vmem:[%s2 + $0x138] sm:$0xff] %vm1816, %v1727
    %1857 = vst.msk [vmem:[%s2 + $0x140] sm:$0xff] %vm1816, %v1728
    %1858 = vst.msk [vmem:[%s2 + $0x148] sm:$0xff] %vm1816, %v1729
    %1859 = vst.msk [vmem:[%s2 + $0x150] sm:$0xff] %vm1816, %v1730
    %1860 = vst.msk [vmem:[%s2 + $0x158] sm:$0xff] %vm1816, %v1731
    %1861 = vst.msk [vmem:[%s2 + $0x160] sm:$0xff] %vm1816, %v1732
    %1862 = vst.msk [vmem:[%s2 + $0x168] sm:$0xff] %vm1816, %v1733
    %1863 = vst.msk [vmem:[%s2 + $0x170] sm:$0xff] %vm1816, %v1734
    %1864 = vst.msk [vmem:[%s2 + $0x178] sm:$0xff] %vm1816, %v1735
    %1865 = vst.msk [vmem:[%s2 + $0x180] sm:$0xff] %vm1816, %v1736
    %1866 = vst.msk [vmem:[%s2 + $0x188] sm:$0xff] %vm1816, %v1737
    %1867 = vst.msk [vmem:[%s2 + $0x190] sm:$0xff] %vm1816, %v1738
    %1868 = vst.msk [vmem:[%s2 + $0x198] sm:$0xff] %vm1816, %v1739
    %1869 = vst.msk [vmem:[%s2 + $0x1a0] sm:$0xff] %vm1816, %v1740
    %1870 = vst.msk [vmem:[%s2 + $0x1a8] sm:$0xff] %vm1816, %v1741
    %1871 = vst.msk [vmem:[%s2 + $0x1b0] sm:$0xff] %vm1816, %v1742
    %1872 = vst.msk [vmem:[%s2 + $0x1b8] sm:$0xff] %vm1816, %v1743
    %1873 = vst.msk [vmem:[%s2 + $0x1c0] sm:$0xff] %vm1816, %v1744
    %1874 = vst.msk [vmem:[%s2 + $0x1c8] sm:$0xff] %vm1816, %v1745
    %1875 = vst.msk [vmem:[%s2 + $0x1d0] sm:$0xff] %vm1816, %v1746
    %1876 = vst.msk [vmem:[%s2 + $0x1d8] sm:$0xff] %vm1816, %v1747
    %1877 = vst.msk [vmem:[%s2 + $0x1e0] sm:$0xff] %vm1816, %v1748
    %1878 = vst.msk [vmem:[%s2 + $0x1e8] sm:$0xff] %vm1816, %v1749
    %1879 = vst.msk [vmem:[%s2 + $0x1f0] sm:$0xff] %vm1816, %v1750
    %1880 = vst.msk [vmem:[%s2 + $0x1f8] sm:$0xff] %vm1816, %v1751
    %1881 = vst.msk [vmem:[%s2 + $0x200] sm:$0xff] %vm1816, %v1752
    %1882 = vst.msk [vmem:[%s2 + $0x208] sm:$0xff] %vm1816, %v1753
    %1883 = vst.msk [vmem:[%s2 + $0x210] sm:$0xff] %vm1816, %v1754
    %1884 = vst.msk [vmem:[%s2 + $0x218] sm:$0xff] %vm1816, %v1755
    %1885 = vst.msk [vmem:[%s2 + $0x220] sm:$0xff] %vm1816, %v1756
    %1886 = vst.msk [vmem:[%s2 + $0x228] sm:$0xff] %vm1816, %v1757
    %1887 = vst.msk [vmem:[%s2 + $0x230] sm:$0xff] %vm1816, %v1758
    %1888 = vst.msk [vmem:[%s2 + $0x238] sm:$0xff] %vm1816, %v1759
    %1889 = vst.msk [vmem:[%s2 + $0x240] sm:$0xff] %vm1816, %v1760
    %1890 = vst.msk [vmem:[%s2 + $0x248] sm:$0xff] %vm1816, %v1761
    %1891 = vst.msk [vmem:[%s2 + $0x250] sm:$0xff] %vm1816, %v1762
    %1892 = vst.msk [vmem:[%s2 + $0x258] sm:$0xff] %vm1816, %v1763
    %1893 = vst.msk [vmem:[%s2 + $0x260] sm:$0xff] %vm1816, %v1764
    %1894 = vst.msk [vmem:[%s2 + $0x268] sm:$0xff] %vm1816, %v1765
    %1895 = vst.msk [vmem:[%s2 + $0x270] sm:$0xff] %vm1816, %v1766
    %1896 = vst.msk [vmem:[%s2 + $0x278] sm:$0xff] %vm1816, %v1767
    %1897 = vst.msk [vmem:[%s2 + $0x280] sm:$0xff] %vm1816, %v1768
    %1898 = vst.msk [vmem:[%s2 + $0x288] sm:$0xff] %vm1816, %v1769
    %1899 = vst.msk [vmem:[%s2 + $0x290] sm:$0xff] %vm1816, %v1770
    %1900 = vst.msk [vmem:[%s2 + $0x298] sm:$0xff] %vm1816, %v1771
    %1901 = vst.msk [vmem:[%s2 + $0x2a0] sm:$0xff] %vm1816, %v1772
    %1902 = vst.msk [vmem:[%s2 + $0x2a8] sm:$0xff] %vm1816, %v1773
    %1903 = vst.msk [vmem:[%s2 + $0x2b0] sm:$0xff] %vm1816, %v1774
    %1904 = vst.msk [vmem:[%s2 + $0x2b8] sm:$0xff] %vm1816, %v1775
    %1905 = vst.msk [vmem:[%s2 + $0x2c0] sm:$0xff] %vm1816, %v1776
    %1906 = vst.msk [vmem:[%s2 + $0x2c8] sm:$0xff] %vm1816, %v1777
    %1907 = vst.msk [vmem:[%s2 + $0x2d0] sm:$0xff] %vm1816, %v1778
    %1908 = vst.msk [vmem:[%s2 + $0x2d8] sm:$0xff] %vm1816, %v1779
    %1909 = vst.msk [vmem:[%s2 + $0x2e0] sm:$0xff] %vm1816, %v1780
    %1910 = vst.msk [vmem:[%s2 + $0x2e8] sm:$0xff] %vm1816, %v1781
    %1911 = vst.msk [vmem:[%s2 + $0x2f0] sm:$0xff] %vm1816, %v1782
    %1912 = vst.msk [vmem:[%s2 + $0x2f8] sm:$0xff] %vm1816, %v1783
    %1913 = vst.msk [vmem:[%s2 + $0x300] sm:$0xff] %vm1816, %v1784
    %1914 = vst.msk [vmem:[%s2 + $0x308] sm:$0xff] %vm1816, %v1785
    %1915 = vst.msk [vmem:[%s2 + $0x310] sm:$0xff] %vm1816, %v1786
    %1916 = vst.msk [vmem:[%s2 + $0x318] sm:$0xff] %vm1816, %v1787
    %1917 = vst.msk [vmem:[%s2 + $0x320] sm:$0xff] %vm1816, %v1788
    %1918 = vst.msk [vmem:[%s2 + $0x328] sm:$0xff] %vm1816, %v1789
    %1919 = vst.msk [vmem:[%s2 + $0x330] sm:$0xff] %vm1816, %v1790
    %1920 = vst.msk [vmem:[%s2 + $0x338] sm:$0xff] %vm1816, %v1791
    %1921 = vst.msk [vmem:[%s2 + $0x340] sm:$0xff] %vm1816, %v1792
    %1922 = vst.msk [vmem:[%s2 + $0x348] sm:$0xff] %vm1816, %v1793
    %1923 = vst.msk [vmem:[%s2 + $0x350] sm:$0xff] %vm1816, %v1794
    %1924 = vst.msk [vmem:[%s2 + $0x358] sm:$0xff] %vm1816, %v1795
    %1925 = vst.msk [vmem:[%s2 + $0x360] sm:$0xff] %vm1816, %v1796
    %1926 = vst.msk [vmem:[%s2 + $0x368] sm:$0xff] %vm1816, %v1797
    %1927 = vst.msk [vmem:[%s2 + $0x370] sm:$0xff] %vm1816, %v1798
    %1928 = vst.msk [vmem:[%s2 + $0x378] sm:$0xff] %vm1816, %v1799
    %1929 = vst.msk [vmem:[%s2 + $0x380] sm:$0xff] %vm1816, %v1800
    %1930 = vst.msk [vmem:[%s2 + $0x388] sm:$0xff] %vm1816, %v1801
    %1931 = vst.msk [vmem:[%s2 + $0x390] sm:$0xff] %vm1816, %v1802
    %1932 = vst.msk [vmem:[%s2 + $0x398] sm:$0xff] %vm1816, %v1803
    %1933 = vst.msk [vmem:[%s2 + $0x3a0] sm:$0xff] %vm1816, %v1804
    %1934 = vst.msk [vmem:[%s2 + $0x3a8] sm:$0xff] %vm1816, %v1805
    %1935 = vst.msk [vmem:[%s2 + $0x3b0] sm:$0xff] %vm1816, %v1806
    %1936 = vst.msk [vmem:[%s2 + $0x3b8] sm:$0xff] %vm1816, %v1807
    %1937 = vst.msk [vmem:[%s2 + $0x3c0] sm:$0xff] %vm1816, %v1808
    %1938 = vst.msk [vmem:[%s2 + $0x3c8] sm:$0xff] %vm1816, %v1809
    %1939 = vst.msk [vmem:[%s2 + $0x3d0] sm:$0xff] %vm1816, %v1810
    %1940 = vst.msk [vmem:[%s2 + $0x3d8] sm:$0xff] %vm1816, %v1811
    %1941 = vst.msk [vmem:[%s2 + $0x3e0] sm:$0xff] %vm1816, %v1812
    %1942 = vst.msk [vmem:[%s2 + $0x3e8] sm:$0xff] %vm1816, %v1813
    %1943 = vst.msk [vmem:[%s2 + $0x3f0] sm:$0xff] %vm1816, %v1814
    %1944 = vst.msk [vmem:[%s2 + $0x3f8] sm:$0xff] %vm1816, %v1815
    // Predicated region
    $region18: #{tpu_custom_call.1} parent=1 // pred_check
      _
    $region19: #{tpu_custom_call.1} parent=1 // pred_check_branch
      %1946 = sbr.rel (0) target = $region21
    $region20: #{tpu_custom_call.1} parent=1 // pred_region
      _
    $region21: #{tpu_custom_call.1} parent=1 // pred_fallthru
      _
    // Predicated region
    $region22: #{tpu_custom_call.1} parent=1 // pred_check
      _
    $region23: #{tpu_custom_call.1} parent=1 // pred_check_branch
      %1948 = sbr.rel (0) target = $region25
    $region24: #{tpu_custom_call.1} parent=1 // pred_region
      _
    $region25: #{tpu_custom_call.1} parent=1 // pred_fallthru
      _
    %1949 = vsyncpa [#allocation3], 1
    %1950 = vsyncpa [#allocation5], 1

</llo_original>
